<compile_context>
chip_gen: v6e
topology: v6e:2x2x1
jax: 0.10.0
libtpu: 0.0.40
codegen_flags: <defaults>
</compile_context>

<pallas_src>
import math
import functools

import jax
import jax.numpy as jnp
import numpy as np
from jax.experimental import pallas as pl
from jax.experimental.pallas import tpu as pltpu


def _self_attn_kernel(x_ref, pos_ref,
                      wqk_ref, bqk_ref,
                      wv_ref, bv_ref,
                      wo_ref, bo_ref,
                      gamma_ref, beta_ref,
                      out_ref,
                      *, batch: int, nhead: int, eps: float):
    BS, E = x_ref.shape            # (B*S, E), batch-major rows
    B, H = batch, nhead
    S = BS // B
    dh = E // H

    x = x_ref[...]                 # (B*S, E)   tgt
    qk_in = x + pos_ref[...]       # q = k = tgt + query_pos

    # Batched projections over all B*S rows.  Q weights/bias are pre-scaled by
    # 1/sqrt(dh) on the host, so no score scaling is needed below.
    qk = jnp.dot(qk_in, wqk_ref[...], preferred_element_type=jnp.float32) + bqk_ref[...]  # (B*S, 2E)
    v = jnp.dot(x, wv_ref[...], preferred_element_type=jnp.float32) + bv_ref[...]         # (B*S, E)

    # Build (G, S, dh) head-major operands, G = B*H, via tile-aligned static
    # slices (S rows are a multiple of 8 sublanes, dh lanes per head).
    def to_heads(m, col0):
        return jnp.stack(
            [m[b * S:(b + 1) * S, col0 + h * dh: col0 + (h + 1) * dh]
             for b in range(B) for h in range(H)], axis=0)

    q_g = to_heads(qk, 0)          # (G, S, dh)
    k_g = to_heads(qk, E)          # (G, S, dh)
    v_g = to_heads(v, 0)           # (G, S, dh)

    # Scores for all batches & heads in one batched contraction; the K
    # "transpose" is folded into the contraction dims.
    s = jnp.einsum("gsd,gtd->gst", q_g, k_g,
                   preferred_element_type=jnp.float32)              # (G, S, S)

    # Single softmax pass (exact denominator: tiny (G,S,1) tensor).
    s = s - jnp.max(s, axis=-1, keepdims=True)
    p = jnp.exp(s)
    p = p * (1.0 / jnp.sum(p, axis=-1, keepdims=True))

    o = jnp.einsum("gst,gtd->gsd", p, v_g,
                   preferred_element_type=jnp.float32)              # (G, S, dh)

    # Repack to (B*S, E) and apply the output projection as ONE matmul (K = E).
    o_flat = jnp.concatenate(
        [jnp.concatenate([o[b * H + h] for h in range(H)], axis=-1)
         for b in range(B)], axis=0)                                # (B*S, E)
    attn = jnp.dot(o_flat, wo_ref[...],
                   preferred_element_type=jnp.float32) + bo_ref[...]

    # Residual + LayerNorm over d_model (dropout = 0 -> identity).
    y = x + attn
    mean = jnp.mean(y, axis=-1, keepdims=True)
    d = y - mean
    var = jnp.mean(d * d, axis=-1, keepdims=True)
    out_ref[...] = (d * jax.lax.rsqrt(var + eps)) * gamma_ref[...] + beta_ref[...]


def self_attention_layer(tgt_sbe, query_pos_sbe, params, *, nhead: int, eps: float = 1e-5):
    """tgt_sbe, query_pos_sbe: (S, B, E) float32.  Returns (S, B, E)."""
    S, B, E = tgt_sbe.shape
    assert E % nhead == 0, "d_model must be divisible by nhead"
    dh = E // nhead
    scale = 1.0 / math.sqrt(dh)

    # Batch-major (B*S, E) slabs for the kernel (tiny XLA transpose, not a
    # kernel-side relayout).
    x = jnp.transpose(tgt_sbe, (1, 0, 2)).reshape(B * S, E)
    pos = jnp.transpose(query_pos_sbe, (1, 0, 2)).reshape(B * S, E)

    # Pre-transposed / fused weights; 1/sqrt(dh) folded into Q weights & bias.
    w_qk = jnp.concatenate([params["wq"].T * scale, params["wk"].T], axis=1)   # (E, 2E)
    b_qk = jnp.concatenate([params["bq"] * scale, params["bk"]]).reshape(1, 2 * E)
    w_v = params["wv"].T                                                       # (E, E)
    b_v = params["bv"].reshape(1, E)
    w_o = params["wo"].T                                                       # (E, E)
    b_o = params["bo"].reshape(1, E)
    gamma = params["ln_gamma"].reshape(1, E)
    beta = params["ln_beta"].reshape(1, E)

    kernel = functools.partial(_self_attn_kernel, batch=B, nhead=nhead, eps=eps)

    # Advisory cost estimate so XLA can schedule neighbours around the call.
    flops = (2 * B * S * E * (2 * E)      # fused Q|K projection
             + 2 * B * S * E * E          # V projection
             + 2 * B * S * S * E          # Q K^T (all heads)
             + 2 * B * S * S * E          # P V   (all heads)
             + 2 * B * S * E * E)         # output projection
    bytes_accessed = 4 * (3 * B * S * E + 4 * E * E + 8 * E)
    cost = pl.CostEstimate(flops=flops,
                           transcendentals=B * nhead * S * S,
                           bytes_accessed=bytes_accessed)

    in_specs = [pl.BlockSpec(memory_space=pltpu.MemorySpace.VMEM) for _ in range(10)]
    out_spec = pl.BlockSpec(memory_space=pltpu.MemorySpace.VMEM)

    out = pl.pallas_call(
        kernel,
        out_shape=jax.ShapeDtypeStruct((B * S, E), jnp.float32),
        in_specs=in_specs,
        out_specs=out_spec,
        cost_estimate=cost,
    )(x, pos, w_qk, b_qk, w_v, b_v, w_o, b_o, gamma, beta)

    return jnp.transpose(out.reshape(B, S, E), (1, 0, 2))


def _xavier_uniform(key, shape):
    fan_out, fan_in = shape
    limit = math.sqrt(6.0 / (fan_in + fan_out))
    return jax.random.uniform(key, shape, jnp.float32, -limit, limit)


def _reference(tgt, pos, params, nhead, eps=1e-5):
    """Pure-JAX reference matching PyTorch forward_post semantics."""
    S, B, E = tgt.shape
    dh = E // nhead
    qk_in = tgt + pos
    q = jnp.einsum("sbe,fe->sbf", qk_in, params["wq"]) + params["bq"]
    k = jnp.einsum("sbe,fe->sbf", qk_in, params["wk"]) + params["bk"]
    v = jnp.einsum("sbe,fe->sbf", tgt, params["wv"]) + params["bv"]

    def split(x):  # (S,B,E) -> (B,H,S,dh)
        return jnp.transpose(x.reshape(S, B, nhead, dh), (1, 2, 0, 3))

    qh, kh, vh = split(q), split(k), split(v)
    scores = jnp.einsum("bhsd,bhtd->bhst", qh, kh) / math.sqrt(dh)
    p = jax.nn.softmax(scores, axis=-1)
    o = jnp.einsum("bhst,bhtd->bhsd", p, vh)                       # (B,H,S,dh)
    o = jnp.transpose(o, (2, 0, 1, 3)).reshape(S, B, E)
    o = jnp.einsum("sbe,fe->sbf", o, params["wo"]) + params["bo"]
    x = tgt + o
    mean = jnp.mean(x, -1, keepdims=True)
    var = jnp.mean((x - mean) ** 2, -1, keepdims=True)
    return ((x - mean) / jnp.sqrt(var + eps)) * params["ln_gamma"] + params["ln_beta"]


if __name__ == "__main__":
    d_model, nhead = 32, 4
    S, B = 16, 2

    key = jax.random.PRNGKey(0)
    keys = jax.random.split(key, 8)

    # Deterministic parameter init (xavier uniform weights, zero biases,
    # LayerNorm gamma=1 / beta=0), mirroring the module's _reset_parameters.
    in_proj = _xavier_uniform(keys[0], (3 * d_model, d_model))
    params = {
        "wq": in_proj[0 * d_model:1 * d_model],
        "wk": in_proj[1 * d_model:2 * d_model],
        "wv": in_proj[2 * d_model:3 * d_model],
        "bq": jnp.zeros((d_model,), jnp.float32),
        "bk": jnp.zeros((d_model,), jnp.float32),
        "bv": jnp.zeros((d_model,), jnp.float32),
        "wo": _xavier_uniform(keys[1], (d_model, d_model)),
        "bo": jnp.zeros((d_model,), jnp.float32),
        "ln_gamma": jnp.ones((d_model,), jnp.float32),
        "ln_beta": jnp.zeros((d_model,), jnp.float32),
    }

    tgt = jax.random.normal(keys[2], (S, B, d_model), jnp.float32)
    query_pos = jax.random.normal(keys[3], (S, B, d_model), jnp.float32)

    out = self_attention_layer(tgt, query_pos, params, nhead=nhead)
    out = jax.block_until_ready(out)

    ref = _reference(tgt, query_pos, params, nhead)
    np.testing.assert_allclose(np.asarray(out), np.asarray(ref), rtol=2e-3, atol=2e-3)

    print("KERNEL_OK")
</pallas_src>

<mosaic_0001>
module attributes {stable_mosaic.version = 11 : i64} {
  func.func @_self_attn_kernel(%arg0: memref<32x32xf32, #tpu.memory_space<vmem>>, %arg1: memref<32x32xf32, #tpu.memory_space<vmem>>, %arg2: memref<32x64xf32, #tpu.memory_space<vmem>>, %arg3: memref<1x64xf32, #tpu.memory_space<vmem>>, %arg4: memref<32x32xf32, #tpu.memory_space<vmem>>, %arg5: memref<1x32xf32, #tpu.memory_space<vmem>>, %arg6: memref<32x32xf32, #tpu.memory_space<vmem>>, %arg7: memref<1x32xf32, #tpu.memory_space<vmem>>, %arg8: memref<1x32xf32, #tpu.memory_space<vmem>>, %arg9: memref<1x32xf32, #tpu.memory_space<vmem>>, %arg10: memref<32x32xf32, #tpu.memory_space<vmem>>) attributes {dimension_semantics = [], scalar_prefetch = 0 : i64, scratch_operands = 0 : i64, tpu.core_type = #tpu.core_type<tc>} {
    %c0 = arith.constant 0 : index
    %c0_0 = arith.constant 0 : index
    %0 = vector.load %arg0[%c0, %c0_0] : memref<32x32xf32, #tpu.memory_space<vmem>>, vector<32x32xf32>
    %c0_1 = arith.constant 0 : index
    %c0_2 = arith.constant 0 : index
    %1 = vector.load %arg1[%c0_1, %c0_2] : memref<32x32xf32, #tpu.memory_space<vmem>>, vector<32x32xf32>
    %2 = arith.addf %0, %1 : vector<32x32xf32>
    %c0_3 = arith.constant 0 : index
    %c0_4 = arith.constant 0 : index
    %3 = vector.load %arg2[%c0_3, %c0_4] : memref<32x64xf32, #tpu.memory_space<vmem>>, vector<32x64xf32>
    %cst = arith.constant dense<0.000000e+00> : vector<32x64xf32>
    %4 = tpu.matmul %2, %3, %cst {dimension_numbers = #tpu.dot_dimension_numbers<[1], [0], [0], [1], [0, 0, 1, 1], [], []>} : vector<32x32xf32>, vector<32x64xf32>, vector<32x64xf32> -> vector<32x64xf32>
    %c0_5 = arith.constant 0 : index
    %c0_6 = arith.constant 0 : index
    %5 = vector.load %arg3[%c0_5, %c0_6] : memref<1x64xf32, #tpu.memory_space<vmem>>, vector<1x64xf32>
    %6 = vector.broadcast %5 : vector<1x64xf32> to vector<32x64xf32>
    %7 = arith.addf %4, %6 : vector<32x64xf32>
    %c0_7 = arith.constant 0 : index
    %c0_8 = arith.constant 0 : index
    %8 = vector.load %arg4[%c0_7, %c0_8] : memref<32x32xf32, #tpu.memory_space<vmem>>, vector<32x32xf32>
    %cst_9 = arith.constant dense<0.000000e+00> : vector<32x32xf32>
    %9 = tpu.matmul %0, %8, %cst_9 {dimension_numbers = #tpu.dot_dimension_numbers<[1], [0], [0], [1], [0, 0, 1, 1], [], []>} : vector<32x32xf32>, vector<32x32xf32>, vector<32x32xf32> -> vector<32x32xf32>
    %c0_10 = arith.constant 0 : index
    %c0_11 = arith.constant 0 : index
    %10 = vector.load %arg5[%c0_10, %c0_11] : memref<1x32xf32, #tpu.memory_space<vmem>>, vector<1x32xf32>
    %11 = vector.broadcast %10 : vector<1x32xf32> to vector<32x32xf32>
    %12 = arith.addf %9, %11 : vector<32x32xf32>
    %13 = vector.extract_strided_slice %7 {offsets = [0, 0], sizes = [16, 8], strides = [1, 1]} : vector<32x64xf32> to vector<16x8xf32>
    %14 = vector.extract_strided_slice %7 {offsets = [0, 8], sizes = [16, 8], strides = [1, 1]} : vector<32x64xf32> to vector<16x8xf32>
    %15 = vector.extract_strided_slice %7 {offsets = [0, 16], sizes = [16, 8], strides = [1, 1]} : vector<32x64xf32> to vector<16x8xf32>
    %16 = vector.extract_strided_slice %7 {offsets = [0, 24], sizes = [16, 8], strides = [1, 1]} : vector<32x64xf32> to vector<16x8xf32>
    %17 = vector.extract_strided_slice %7 {offsets = [16, 0], sizes = [16, 8], strides = [1, 1]} : vector<32x64xf32> to vector<16x8xf32>
    %18 = vector.extract_strided_slice %7 {offsets = [16, 8], sizes = [16, 8], strides = [1, 1]} : vector<32x64xf32> to vector<16x8xf32>
    %19 = vector.extract_strided_slice %7 {offsets = [16, 16], sizes = [16, 8], strides = [1, 1]} : vector<32x64xf32> to vector<16x8xf32>
    %20 = vector.extract_strided_slice %7 {offsets = [16, 24], sizes = [16, 8], strides = [1, 1]} : vector<32x64xf32> to vector<16x8xf32>
    %21 = vector.shape_cast %13 : vector<16x8xf32> to vector<1x16x8xf32>
    %22 = vector.shape_cast %14 : vector<16x8xf32> to vector<1x16x8xf32>
    %23 = vector.shape_cast %15 : vector<16x8xf32> to vector<1x16x8xf32>
    %24 = vector.shape_cast %16 : vector<16x8xf32> to vector<1x16x8xf32>
    %25 = vector.shape_cast %17 : vector<16x8xf32> to vector<1x16x8xf32>
    %26 = vector.shape_cast %18 : vector<16x8xf32> to vector<1x16x8xf32>
    %27 = vector.shape_cast %19 : vector<16x8xf32> to vector<1x16x8xf32>
    %28 = vector.shape_cast %20 : vector<16x8xf32> to vector<1x16x8xf32>
    %29 = tpu.concatenate %21, %22, %23, %24, %25, %26, %27, %28 in 0 : vector<1x16x8xf32>, vector<1x16x8xf32>, vector<1x16x8xf32>, vector<1x16x8xf32>, vector<1x16x8xf32>, vector<1x16x8xf32>, vector<1x16x8xf32>, vector<1x16x8xf32> -> vector<8x16x8xf32>
    %30 = vector.extract_strided_slice %7 {offsets = [0, 32], sizes = [16, 8], strides = [1, 1]} : vector<32x64xf32> to vector<16x8xf32>
    %31 = vector.extract_strided_slice %7 {offsets = [0, 40], sizes = [16, 8], strides = [1, 1]} : vector<32x64xf32> to vector<16x8xf32>
    %32 = vector.extract_strided_slice %7 {offsets = [0, 48], sizes = [16, 8], strides = [1, 1]} : vector<32x64xf32> to vector<16x8xf32>
    %33 = vector.extract_strided_slice %7 {offsets = [0, 56], sizes = [16, 8], strides = [1, 1]} : vector<32x64xf32> to vector<16x8xf32>
    %34 = vector.extract_strided_slice %7 {offsets = [16, 32], sizes = [16, 8], strides = [1, 1]} : vector<32x64xf32> to vector<16x8xf32>
    %35 = vector.extract_strided_slice %7 {offsets = [16, 40], sizes = [16, 8], strides = [1, 1]} : vector<32x64xf32> to vector<16x8xf32>
    %36 = vector.extract_strided_slice %7 {offsets = [16, 48], sizes = [16, 8], strides = [1, 1]} : vector<32x64xf32> to vector<16x8xf32>
    %37 = vector.extract_strided_slice %7 {offsets = [16, 56], sizes = [16, 8], strides = [1, 1]} : vector<32x64xf32> to vector<16x8xf32>
    %38 = vector.shape_cast %30 : vector<16x8xf32> to vector<1x16x8xf32>
    %39 = vector.shape_cast %31 : vector<16x8xf32> to vector<1x16x8xf32>
    %40 = vector.shape_cast %32 : vector<16x8xf32> to vector<1x16x8xf32>
    %41 = vector.shape_cast %33 : vector<16x8xf32> to vector<1x16x8xf32>
    %42 = vector.shape_cast %34 : vector<16x8xf32> to vector<1x16x8xf32>
    %43 = vector.shape_cast %35 : vector<16x8xf32> to vector<1x16x8xf32>
    %44 = vector.shape_cast %36 : vector<16x8xf32> to vector<1x16x8xf32>
    %45 = vector.shape_cast %37 : vector<16x8xf32> to vector<1x16x8xf32>
    %46 = tpu.concatenate %38, %39, %40, %41, %42, %43, %44, %45 in 0 : vector<1x16x8xf32>, vector<1x16x8xf32>, vector<1x16x8xf32>, vector<1x16x8xf32>, vector<1x16x8xf32>, vector<1x16x8xf32>, vector<1x16x8xf32>, vector<1x16x8xf32> -> vector<8x16x8xf32>
    %47 = vector.extract_strided_slice %12 {offsets = [0, 0], sizes = [16, 8], strides = [1, 1]} : vector<32x32xf32> to vector<16x8xf32>
    %48 = vector.extract_strided_slice %12 {offsets = [0, 8], sizes = [16, 8], strides = [1, 1]} : vector<32x32xf32> to vector<16x8xf32>
    %49 = vector.extract_strided_slice %12 {offsets = [0, 16], sizes = [16, 8], strides = [1, 1]} : vector<32x32xf32> to vector<16x8xf32>
    %50 = vector.extract_strided_slice %12 {offsets = [0, 24], sizes = [16, 8], strides = [1, 1]} : vector<32x32xf32> to vector<16x8xf32>
    %51 = vector.extract_strided_slice %12 {offsets = [16, 0], sizes = [16, 8], strides = [1, 1]} : vector<32x32xf32> to vector<16x8xf32>
    %52 = vector.extract_strided_slice %12 {offsets = [16, 8], sizes = [16, 8], strides = [1, 1]} : vector<32x32xf32> to vector<16x8xf32>
    %53 = vector.extract_strided_slice %12 {offsets = [16, 16], sizes = [16, 8], strides = [1, 1]} : vector<32x32xf32> to vector<16x8xf32>
    %54 = vector.extract_strided_slice %12 {offsets = [16, 24], sizes = [16, 8], strides = [1, 1]} : vector<32x32xf32> to vector<16x8xf32>
    %55 = vector.shape_cast %47 : vector<16x8xf32> to vector<1x16x8xf32>
    %56 = vector.shape_cast %48 : vector<16x8xf32> to vector<1x16x8xf32>
    %57 = vector.shape_cast %49 : vector<16x8xf32> to vector<1x16x8xf32>
    %58 = vector.shape_cast %50 : vector<16x8xf32> to vector<1x16x8xf32>
    %59 = vector.shape_cast %51 : vector<16x8xf32> to vector<1x16x8xf32>
    %60 = vector.shape_cast %52 : vector<16x8xf32> to vector<1x16x8xf32>
    %61 = vector.shape_cast %53 : vector<16x8xf32> to vector<1x16x8xf32>
    %62 = vector.shape_cast %54 : vector<16x8xf32> to vector<1x16x8xf32>
    %63 = tpu.concatenate %55, %56, %57, %58, %59, %60, %61, %62 in 0 : vector<1x16x8xf32>, vector<1x16x8xf32>, vector<1x16x8xf32>, vector<1x16x8xf32>, vector<1x16x8xf32>, vector<1x16x8xf32>, vector<1x16x8xf32>, vector<1x16x8xf32> -> vector<8x16x8xf32>
    "tpu.trace_start"() <{level = 10 : i32, message = "gsd,gtd->gst"}> : () -> ()
    %cst_12 = arith.constant dense<0.000000e+00> : vector<8x16x16xf32>
    %64 = tpu.matmul %29, %46, %cst_12 {dimension_numbers = #tpu.dot_dimension_numbers<[2], [2], [1], [1], [0, 0, 0, 1, 1, 1], [0], [0]>} : vector<8x16x8xf32>, vector<8x16x8xf32>, vector<8x16x16xf32> -> vector<8x16x16xf32>
    "tpu.trace_stop"() : () -> ()
    %cst_13 = arith.constant dense<0xFF800000> : vector<8x16xf32>
    %65 = vector.multi_reduction <maximumf>, %64, %cst_13 [2] : vector<8x16x16xf32> to vector<8x16xf32>
    %66 = vector.shape_cast %65 : vector<8x16xf32> to vector<8x16x1xf32>
    %67 = vector.broadcast %66 : vector<8x16x1xf32> to vector<8x16x16xf32>
    %68 = arith.subf %64, %67 : vector<8x16x16xf32>
    %69 = math.exp %68 : vector<8x16x16xf32>
    %cst_14 = arith.constant dense<0.000000e+00> : vector<8x16xf32>
    %70 = vector.multi_reduction <add>, %69, %cst_14 [2] : vector<8x16x16xf32> to vector<8x16xf32>
    %71 = vector.shape_cast %70 : vector<8x16xf32> to vector<8x16x1xf32>
    %cst_15 = arith.constant 1.000000e+00 : f32
    %72 = vector.broadcast %cst_15 : f32 to vector<8x16x1xf32>
    %73 = arith.divf %72, %71 : vector<8x16x1xf32>
    %74 = vector.broadcast %73 : vector<8x16x1xf32> to vector<8x16x16xf32>
    %75 = arith.mulf %69, %74 : vector<8x16x16xf32>
    "tpu.trace_start"() <{level = 10 : i32, message = "gst,gtd->gsd"}> : () -> ()
    %cst_16 = arith.constant dense<0.000000e+00> : vector<8x16x8xf32>
    %76 = tpu.matmul %75, %63, %cst_16 {dimension_numbers = #tpu.dot_dimension_numbers<[2], [1], [1], [2], [0, 0, 0, 1, 1, 2], [0], [0]>} : vector<8x16x16xf32>, vector<8x16x8xf32>, vector<8x16x8xf32> -> vector<8x16x8xf32>
    "tpu.trace_stop"() : () -> ()
    %77 = vector.extract_strided_slice %76 {offsets = [0, 0, 0], sizes = [1, 16, 8], strides = [1, 1, 1]} : vector<8x16x8xf32> to vector<1x16x8xf32>
    %78 = vector.shape_cast %77 : vector<1x16x8xf32> to vector<16x8xf32>
    %79 = vector.extract_strided_slice %76 {offsets = [1, 0, 0], sizes = [1, 16, 8], strides = [1, 1, 1]} : vector<8x16x8xf32> to vector<1x16x8xf32>
    %80 = vector.shape_cast %79 : vector<1x16x8xf32> to vector<16x8xf32>
    %81 = vector.extract_strided_slice %76 {offsets = [2, 0, 0], sizes = [1, 16, 8], strides = [1, 1, 1]} : vector<8x16x8xf32> to vector<1x16x8xf32>
    %82 = vector.shape_cast %81 : vector<1x16x8xf32> to vector<16x8xf32>
    %83 = vector.extract_strided_slice %76 {offsets = [3, 0, 0], sizes = [1, 16, 8], strides = [1, 1, 1]} : vector<8x16x8xf32> to vector<1x16x8xf32>
    %84 = vector.shape_cast %83 : vector<1x16x8xf32> to vector<16x8xf32>
    %85 = tpu.concatenate %78, %80, %82, %84 in 1 : vector<16x8xf32>, vector<16x8xf32>, vector<16x8xf32>, vector<16x8xf32> -> vector<16x32xf32>
    %86 = vector.extract_strided_slice %76 {offsets = [4, 0, 0], sizes = [1, 16, 8], strides = [1, 1, 1]} : vector<8x16x8xf32> to vector<1x16x8xf32>
    %87 = vector.shape_cast %86 : vector<1x16x8xf32> to vector<16x8xf32>
    %88 = vector.extract_strided_slice %76 {offsets = [5, 0, 0], sizes = [1, 16, 8], strides = [1, 1, 1]} : vector<8x16x8xf32> to vector<1x16x8xf32>
    %89 = vector.shape_cast %88 : vector<1x16x8xf32> to vector<16x8xf32>
    %90 = vector.extract_strided_slice %76 {offsets = [6, 0, 0], sizes = [1, 16, 8], strides = [1, 1, 1]} : vector<8x16x8xf32> to vector<1x16x8xf32>
    %91 = vector.shape_cast %90 : vector<1x16x8xf32> to vector<16x8xf32>
    %92 = vector.extract_strided_slice %76 {offsets = [7, 0, 0], sizes = [1, 16, 8], strides = [1, 1, 1]} : vector<8x16x8xf32> to vector<1x16x8xf32>
    %93 = vector.shape_cast %92 : vector<1x16x8xf32> to vector<16x8xf32>
    %94 = tpu.concatenate %87, %89, %91, %93 in 1 : vector<16x8xf32>, vector<16x8xf32>, vector<16x8xf32>, vector<16x8xf32> -> vector<16x32xf32>
    %95 = tpu.concatenate %85, %94 in 0 : vector<16x32xf32>, vector<16x32xf32> -> vector<32x32xf32>
    %c0_17 = arith.constant 0 : index
    %c0_18 = arith.constant 0 : index
    %96 = vector.load %arg6[%c0_17, %c0_18] : memref<32x32xf32, #tpu.memory_space<vmem>>, vector<32x32xf32>
    %cst_19 = arith.constant dense<0.000000e+00> : vector<32x32xf32>
    %97 = tpu.matmul %95, %96, %cst_19 {dimension_numbers = #tpu.dot_dimension_numbers<[1], [0], [0], [1], [0, 0, 1, 1], [], []>} : vector<32x32xf32>, vector<32x32xf32>, vector<32x32xf32> -> vector<32x32xf32>
    %c0_20 = arith.constant 0 : index
    %c0_21 = arith.constant 0 : index
    %98 = vector.load %arg7[%c0_20, %c0_21] : memref<1x32xf32, #tpu.memory_space<vmem>>, vector<1x32xf32>
    %99 = vector.broadcast %98 : vector<1x32xf32> to vector<32x32xf32>
    %100 = arith.addf %97, %99 : vector<32x32xf32>
    %101 = arith.addf %0, %100 : vector<32x32xf32>
    %cst_22 = arith.constant dense<0.000000e+00> : vector<32xf32>
    %102 = vector.multi_reduction <add>, %101, %cst_22 [1] : vector<32x32xf32> to vector<32xf32>
    %103 = vector.shape_cast %102 : vector<32xf32> to vector<32x1xf32>
    %cst_23 = arith.constant 3.200000e+01 : f32
    %104 = vector.broadcast %cst_23 : f32 to vector<32x1xf32>
    %105 = arith.divf %103, %104 : vector<32x1xf32>
    %106 = vector.broadcast %105 : vector<32x1xf32> to vector<32x32xf32>
    %107 = arith.subf %101, %106 : vector<32x32xf32>
    %108 = arith.mulf %107, %107 : vector<32x32xf32>
    %cst_24 = arith.constant dense<0.000000e+00> : vector<32xf32>
    %109 = vector.multi_reduction <add>, %108, %cst_24 [1] : vector<32x32xf32> to vector<32xf32>
    %110 = vector.shape_cast %109 : vector<32xf32> to vector<32x1xf32>
    %cst_25 = arith.constant 3.200000e+01 : f32
    %111 = vector.broadcast %cst_25 : f32 to vector<32x1xf32>
    %112 = arith.divf %110, %111 : vector<32x1xf32>
    %cst_26 = arith.constant 9.99999974E-6 : f32
    %113 = vector.broadcast %cst_26 : f32 to vector<32x1xf32>
    %114 = arith.addf %112, %113 : vector<32x1xf32>
    %115 = math.rsqrt %114 : vector<32x1xf32>
    %116 = vector.broadcast %115 : vector<32x1xf32> to vector<32x32xf32>
    %117 = arith.mulf %107, %116 : vector<32x32xf32>
    %c0_27 = arith.constant 0 : index
    %c0_28 = arith.constant 0 : index
    %118 = vector.load %arg8[%c0_27, %c0_28] : memref<1x32xf32, #tpu.memory_space<vmem>>, vector<1x32xf32>
    %119 = vector.broadcast %118 : vector<1x32xf32> to vector<32x32xf32>
    %120 = arith.mulf %117, %119 : vector<32x32xf32>
    %c0_29 = arith.constant 0 : index
    %c0_30 = arith.constant 0 : index
    %121 = vector.load %arg9[%c0_29, %c0_30] : memref<1x32xf32, #tpu.memory_space<vmem>>, vector<1x32xf32>
    %122 = vector.broadcast %121 : vector<1x32xf32> to vector<32x32xf32>
    %123 = arith.addf %120, %122 : vector<32x32xf32>
    %c0_31 = arith.constant 0 : index
    %c0_32 = arith.constant 0 : index
    %124 = vector.load %arg10[%c0_31, %c0_32] : memref<32x32xf32, #tpu.memory_space<vmem>>, vector<32x32xf32>
    tpu.vector_store %arg10[%c0_31, %c0_32], %123 {strides = array<i32>} : memref<32x32xf32, #tpu.memory_space<vmem>>, vector<32x32xf32>,
    return
  }
}

</mosaic_0001>

<llo_original>
// kernel: tpu_custom_call.1
$region0: #{tpu_custom_call.1}
  #allocation0 [shape = 'u32[]', space=smem, size = 0x4, offset = 0x4, fixed_abs, tag = 'smem constant byte address 0x4 - core index']
  #allocation1 [shape = 'u32[144,128]{1,0:T(1,128)}', space=vmem, size = 0x12000, scoped, tag = 'internal scratch']
  %s0 = inlined_call_operand.hbm [shape: f32[32,32], index: 0, kind: input, shape index: {}]
  %s1 = inlined_call_operand.hbm [shape: f32[32,32], index: 1, kind: input, shape index: {}]
  %s2 = inlined_call_operand.hbm [shape: f32[32,64], index: 2, kind: input, shape index: {}]
  %s3 = inlined_call_operand.vmem [shape: f32[1,64], index: 3, kind: input, shape index: {}]
  %s4 = inlined_call_operand.hbm [shape: f32[32,32], index: 4, kind: input, shape index: {}]
  %s5 = inlined_call_operand.vmem [shape: f32[1,32], index: 5, kind: input, shape index: {}]
  %s6 = inlined_call_operand.hbm [shape: f32[32,32], index: 6, kind: input, shape index: {}]
  %s7 = inlined_call_operand.vmem [shape: f32[1,32], index: 7, kind: input, shape index: {}]
  %s8 = inlined_call_operand.vmem [shape: f32[1,32], index: 8, kind: input, shape index: {}]
  %s9 = inlined_call_operand.vmem [shape: f32[1,32], index: 9, kind: input, shape index: {}]
  %s10 = inlined_call_operand.hbm [shape: f32[32,32], index: 10, kind: output, shape index: {}]
  %s11 = sld [smem:[#allocation0]]
  $region70: #{tpu_custom_call.1} parent=0
    _
  %s13 = ssub.s32 1, %s11
  %s14 = scalar_select 0, %s13, %s11
  $region1: #{tpu_custom_call.1} parent=0
    #allocation2 [shape = 'u8[16384]{0}', space=vmem, size = 0x4000, scoped, tag = 'input window, operand 0, single buffered']
    #allocation3 [shape = 's32[1]{0}', space=sflag, size = 0x4, scoped, tag = 'scoped memory for tpu_custom_call.1']
    #allocation4 [shape = 's32[1]{0}', space=sflag, size = 0x4, scoped, tag = 'scoped memory for tpu_custom_call.1']
    #allocation5 [shape = 'u8[16384]{0}', space=vmem, size = 0x4000, scoped, tag = 'input window, operand 1, single buffered']
    #allocation6 [shape = 's32[1]{0}', space=sflag, size = 0x4, scoped, tag = 'scoped memory for tpu_custom_call.1']
    #allocation7 [shape = 'u8[16384]{0}', space=vmem, size = 0x4000, scoped, tag = 'input window, operand 2, single buffered']
    #allocation8 [shape = 'u8[16384]{0}', space=vmem, size = 0x4000, scoped, tag = 'input window, operand 4, single buffered']
    #allocation9 [shape = 's32[1]{0}', space=sflag, size = 0x4, scoped, tag = 'scoped memory for tpu_custom_call.1']
    #allocation10 [shape = 'u8[16384]{0}', space=vmem, size = 0x4000, scoped, tag = 'input window, operand 6, single buffered']
    #allocation11 [shape = 'u8[16384]{0}', space=vmem, size = 0x4000, scoped, tag = 'output window, operand 0, single buffered']
    %15 = vsyncpa [#allocation3], 0
    %16 = vsyncpa [#allocation6], 0
    %17 = vsyncpa [#allocation9], 0
    %18 = vsyncpa [#allocation4], 0
    // Predicated region
    $region2: #{tpu_custom_call.1} parent=1 // pred_check
      _
    $region3: #{tpu_custom_call.1} parent=1 // pred_check_branch
      %20 = sbr.rel (0) target = $region5
    $region4: #{tpu_custom_call.1} parent=1 // pred_region
      %s22 = ssub.s32 512, 512
      %23 = vsyncadd [#allocation3], %s22
      %s24 = sshll.u32 [#allocation2], 4
      %s25 = int_to_ptr.vmem [resolvable:$true] %s24
      %30 = dma.hbm_to_vmem [thread:$0]  %s0, 512, %s25, [#allocation3], 128, 128, 8
    $region5: #{tpu_custom_call.1} parent=1 // pred_fallthru
      _
    // Predicated region
    $region6: #{tpu_custom_call.1} parent=1 // pred_check
      _
    $region7: #{tpu_custom_call.1} parent=1 // pred_check_branch
      %32 = sbr.rel (0) target = $region9
    $region8: #{tpu_custom_call.1} parent=1 // pred_region
      %s34 = ssub.s32 512, 512
      %35 = vsyncadd [#allocation6], %s34
      %s36 = sshll.u32 [#allocation5], 4
      %s37 = int_to_ptr.vmem [resolvable:$true] %s36
      %42 = dma.hbm_to_vmem [thread:$0]  %s1, 512, %s37, [#allocation6], 128, 128, 8
    $region9: #{tpu_custom_call.1} parent=1 // pred_fallthru
      _
    // Predicated region
    $region10: #{tpu_custom_call.1} parent=1 // pred_check
      _
    $region11: #{tpu_custom_call.1} parent=1 // pred_check_branch
      %44 = sbr.rel (0) target = $region13
    $region12: #{tpu_custom_call.1} parent=1 // pred_region
      %s46 = ssub.s32 512, 512
      %47 = vsyncadd [#allocation6], %s46
      %s48 = sshll.u32 [#allocation7], 4
      %s49 = int_to_ptr.vmem [resolvable:$true] %s48
      %54 = dma.hbm_to_vmem [thread:$0]  %s2, 512, %s49, [#allocation6], 128, 128, 8
    $region13: #{tpu_custom_call.1} parent=1 // pred_fallthru
      _
    // Predicated region
    $region14: #{tpu_custom_call.1} parent=1 // pred_check
      _
    $region15: #{tpu_custom_call.1} parent=1 // pred_check_branch
      %56 = sbr.rel (0) target = $region17
    $region16: #{tpu_custom_call.1} parent=1 // pred_region
      _
    $region17: #{tpu_custom_call.1} parent=1 // pred_fallthru
      _
    // Predicated region
    $region18: #{tpu_custom_call.1} parent=1 // pred_check
      _
    $region19: #{tpu_custom_call.1} parent=1 // pred_check_branch
      %58 = sbr.rel (0) target = $region21
    $region20: #{tpu_custom_call.1} parent=1 // pred_region
      %s60 = ssub.s32 512, 512
      %61 = vsyncadd [#allocation9], %s60
      %s62 = sshll.u32 [#allocation8], 4
      %s63 = int_to_ptr.vmem [resolvable:$true] %s62
      %68 = dma.hbm_to_vmem [thread:$0]  %s4, 512, %s63, [#allocation9], 128, 128, 8
    $region21: #{tpu_custom_call.1} parent=1 // pred_fallthru
      _
    // Predicated region
    $region22: #{tpu_custom_call.1} parent=1 // pred_check
      _
    $region23: #{tpu_custom_call.1} parent=1 // pred_check_branch
      %70 = sbr.rel (0) target = $region25
    $region24: #{tpu_custom_call.1} parent=1 // pred_region
      _
    $region25: #{tpu_custom_call.1} parent=1 // pred_fallthru
      _
    // Predicated region
    $region26: #{tpu_custom_call.1} parent=1 // pred_check
      _
    $region27: #{tpu_custom_call.1} parent=1 // pred_check_branch
      %72 = sbr.rel (0) target = $region29
    $region28: #{tpu_custom_call.1} parent=1 // pred_region
      %s74 = ssub.s32 512, 512
      %75 = vsyncadd [#allocation9], %s74
      %s76 = sshll.u32 [#allocation10], 4
      %s77 = int_to_ptr.vmem [resolvable:$true] %s76
      %82 = dma.hbm_to_vmem [thread:$0]  %s6, 512, %s77, [#allocation9], 128, 128, 8
    $region29: #{tpu_custom_call.1} parent=1 // pred_fallthru
      _
    // Predicated region
    $region30: #{tpu_custom_call.1} parent=1 // pred_check
      _
    $region31: #{tpu_custom_call.1} parent=1 // pred_check_branch
      %84 = sbr.rel (0) target = $region33
    $region32: #{tpu_custom_call.1} parent=1 // pred_region
      _
    $region33: #{tpu_custom_call.1} parent=1 // pred_fallthru
      _
    // Predicated region
    $region34: #{tpu_custom_call.1} parent=1 // pred_check
      _
    $region35: #{tpu_custom_call.1} parent=1 // pred_check_branch
      %86 = sbr.rel (0) target = $region37
    $region36: #{tpu_custom_call.1} parent=1 // pred_region
      _
    $region37: #{tpu_custom_call.1} parent=1 // pred_fallthru
      _
    // Predicated region
    $region38: #{tpu_custom_call.1} parent=1 // pred_check
      _
    $region39: #{tpu_custom_call.1} parent=1 // pred_check_branch
      %88 = sbr.rel (0) target = $region41
    $region40: #{tpu_custom_call.1} parent=1 // pred_region
      _
    $region41: #{tpu_custom_call.1} parent=1 // pred_fallthru
      _
    // Predicated region
    $region42: #{tpu_custom_call.1} parent=1 // pred_check
      _
    $region43: #{tpu_custom_call.1} parent=1 // pred_check_branch
      %90 = sbr.rel (0) target = $region45
    $region44: #{tpu_custom_call.1} parent=1 // pred_region
      %91 = dma.done [#allocation3], 512
    $region45: #{tpu_custom_call.1} parent=1 // pred_fallthru
      _
    // Predicated region
    $region46: #{tpu_custom_call.1} parent=1 // pred_check
      _
    $region47: #{tpu_custom_call.1} parent=1 // pred_check_branch
      %93 = sbr.rel (0) target = $region49
    $region48: #{tpu_custom_call.1} parent=1 // pred_region
      %94 = dma.done [#allocation6], 512
    $region49: #{tpu_custom_call.1} parent=1 // pred_fallthru
      _
    // Predicated region
    $region50: #{tpu_custom_call.1} parent=1 // pred_check
      _
    $region51: #{tpu_custom_call.1} parent=1 // pred_check_branch
      %96 = sbr.rel (0) target = $region53
    $region52: #{tpu_custom_call.1} parent=1 // pred_region
      %97 = dma.done [#allocation6], 512
    $region53: #{tpu_custom_call.1} parent=1 // pred_fallthru
      _
    // Predicated region
    $region54: #{tpu_custom_call.1} parent=1 // pred_check
      _
    $region55: #{tpu_custom_call.1} parent=1 // pred_check_branch
      %99 = sbr.rel (0) target = $region57
    $region56: #{tpu_custom_call.1} parent=1 // pred_region
      %100 = dma.done [#allocation9], 512
    $region57: #{tpu_custom_call.1} parent=1 // pred_fallthru
      _
    // Predicated region
    $region58: #{tpu_custom_call.1} parent=1 // pred_check
      _
    $region59: #{tpu_custom_call.1} parent=1 // pred_check_branch
      %102 = sbr.rel (0) target = $region61
    $region60: #{tpu_custom_call.1} parent=1 // pred_region
      %103 = dma.done [#allocation9], 512
    $region61: #{tpu_custom_call.1} parent=1 // pred_fallthru
      _
    %v104 = vld [vmem:[#allocation2] sm:$0xff]
    %v105 = vld [vmem:[#allocation2 + $0x8] sm:$0xff]
    %v106 = vld [vmem:[#allocation2 + $0x10] sm:$0xff]
    %v107 = vld [vmem:[#allocation2 + $0x18] sm:$0xff]
    %v108 = vld [vmem:[#allocation5] sm:$0xff]
    %v109 = vld [vmem:[#allocation5 + $0x8] sm:$0xff]
    %v110 = vld [vmem:[#allocation5 + $0x10] sm:$0xff]
    %v111 = vld [vmem:[#allocation5 + $0x18] sm:$0xff]
    %v112 = vadd.f32 %v104, %v108
    %v113 = vadd.f32 %v105, %v109
    %v114 = vadd.f32 %v106, %v110
    %v115 = vadd.f32 %v107, %v111
    %v116 = vld [vmem:[#allocation7] sm:$0xff]
    %v117 = vld [vmem:[#allocation7 + $0x8] sm:$0xff]
    %v118 = vld [vmem:[#allocation7 + $0x10] sm:$0xff]
    %v119 = vld [vmem:[#allocation7 + $0x18] sm:$0xff]
    %v120 = vld [vmem:[%s3] sm:$0x1]
    %v122 = vlaneseq
    %v123 = vshrl.u32 %v122, 7
    %v124 = vsub.s32 0, %v123
    %v125 = vrot.slane %v120, %v124
    %vm127 = vcmask 261120
    %v129 = vsel %vm127, %v112, 0
    %v132 = vsel %vm127, %v113, 0
    %v135 = vsel %vm127, %v114, 0
    %v138 = vsel %vm127, %v115, 0
    %140 = vmatprep.subr.mxu0 0.0
    %141 = vmatpush1.msra.mxu0 0.0
    %142 = vmatprep.subr.mxu0 0.0
    %143 = vmatpush1.msra.mxu0 0.0
    %144 = vmatprep.subr.mxu0 0.0
    %145 = vmatpush1.msra.mxu0 0.0
    %146 = vmatprep.subr.mxu0 0.0
    %147 = vmatpush1.msra.mxu0 0.0
    %148 = vmatprep.subr.mxu0 0.0
    %149 = vmatpush1.msra.mxu0 0.0
    %150 = vmatprep.subr.mxu0 0.0
    %151 = vmatpush1.msra.mxu0 0.0
    %152 = vmatprep.subr.mxu0 0.0
    %153 = vmatpush1.msra.mxu0 0.0
    %154 = vmatprep.subr.mxu0 0.0
    %155 = vmatpush1.msra.mxu0 0.0
    %156 = vmatprep.subr.mxu0 0.0
    %157 = vmatpush1.msra.mxu0 0.0
    %158 = vmatprep.subr.mxu0 0.0
    %159 = vmatpush1.msra.mxu0 0.0
    %160 = vmatprep.subr.mxu0 0.0
    %161 = vmatpush1.msra.mxu0 0.0
    %162 = vmatprep.subr.mxu0 0.0
    %163 = vmatpush1.msra.mxu0 0.0
    %164 = vmatprep.subr.mxu0 0.0
    %165 = vmatpush1.msra.mxu0 %v119
    %166 = vmatprep.subr.mxu0 0.0
    %167 = vmatpush1.msra.mxu0 %v118
    %168 = vmatprep.subr.mxu0 0.0
    %169 = vmatpush1.msra.mxu0 %v117
    %170 = vmatprep.subr.mxu0 0.0
    %171 = vmatpush1.msra.mxu0 %v116
    %172 = vmatprep.subr.mxu0 0.0
    %173 = vmatpush2.msra.mxu0 0.0
    %174 = vmatprep.subr.mxu0 0.0
    %175 = vmatpush2.msra.mxu0 0.0
    %176 = vmatprep.subr.mxu0 0.0
    %177 = vmatpush2.msra.mxu0 0.0
    %178 = vmatprep.subr.mxu0 0.0
    %179 = vmatpush2.msra.mxu0 0.0
    %180 = vmatprep.subr.mxu0 0.0
    %181 = vmatpush2.msra.mxu0 0.0
    %182 = vmatprep.subr.mxu0 0.0
    %183 = vmatpush2.msra.mxu0 0.0
    %184 = vmatprep.subr.mxu0 0.0
    %185 = vmatpush2.msra.mxu0 0.0
    %186 = vmatprep.subr.mxu0 0.0
    %187 = vmatpush2.msra.mxu0 0.0
    %188 = vmatprep.subr.mxu0 0.0
    %189 = vmatpush2.msra.mxu0 0.0
    %190 = vmatprep.subr.mxu0 0.0
    %191 = vmatpush2.msra.mxu0 0.0
    %192 = vmatprep.subr.mxu0 0.0
    %193 = vmatpush2.msra.mxu0 0.0
    %194 = vmatprep.subr.mxu0 0.0
    %195 = vmatpush2.msra.mxu0 0.0
    %196 = vmatprep.subr.mxu0 0.0
    %197 = vmatpush2.msra.mxu0 0.0
    %198 = vmatprep.subr.mxu0 0.0
    %199 = vmatpush2.msra.mxu0 0.0
    %200 = vmatprep.subr.mxu0 0.0
    %201 = vmatpush2.msra.mxu0 0.0
    %202 = vmatprep.subr.mxu0 0.0
    %203 = vmatpush2.msra.mxu0 0.0
    %204 = vmatprep.mubr.f32.mxu0 0.0
    %205 = vmatmul.mubr.f32.gmra.mxu0 %v129
    %v206 = vpop.f32.mrf.mxu0
    %v207 = vadd.f32 %v125, %v206
    %v208 = vpop.f32.mrf.mxu0
    %209 = vmatprep.mubr.f32.mxu0 0.0
    %210 = vmatmul.mubr.f32.gmra.mxu0 %v132
    %v211 = vpop.f32.mrf.mxu0
    %v212 = vadd.f32 %v125, %v211
    %v213 = vpop.f32.mrf.mxu0
    %214 = vmatprep.mubr.f32.mxu0 0.0
    %215 = vmatmul.mubr.f32.gmra.mxu0 %v135
    %v216 = vpop.f32.mrf.mxu0
    %v217 = vadd.f32 %v125, %v216
    %v218 = vpop.f32.mrf.mxu0
    %219 = vmatprep.mubr.f32.mxu0 0.0
    %220 = vmatmul.mubr.f32.gmra.mxu0 %v138
    %v221 = vpop.f32.mrf.mxu0
    %v222 = vadd.f32 %v125, %v221
    %v223 = vpop.f32.mrf.mxu0
    %224 = vdwg.mxu0
    %v225 = vld [vmem:[#allocation8] sm:$0xff]
    %v226 = vld [vmem:[#allocation8 + $0x8] sm:$0xff]
    %v227 = vld [vmem:[#allocation8 + $0x10] sm:$0xff]
    %v228 = vld [vmem:[#allocation8 + $0x18] sm:$0xff]
    %v229 = vld [vmem:[%s5] sm:$0x1]
    %v231 = vlaneseq
    %v232 = vshrl.u32 %v231, 7
    %v233 = vsub.s32 0, %v232
    %v234 = vrot.slane %v229, %v233
    %v237 = vsel %vm127, %v104, 0
    %v240 = vsel %vm127, %v105, 0
    %v243 = vsel %vm127, %v106, 0
    %v246 = vsel %vm127, %v107, 0
    %248 = vmatprep.subr.mxu0 0.0
    %249 = vmatpush1.msra.mxu0 0.0
    %250 = vmatprep.subr.mxu0 0.0
    %251 = vmatpush1.msra.mxu0 0.0
    %252 = vmatprep.subr.mxu0 0.0
    %253 = vmatpush1.msra.mxu0 0.0
    %254 = vmatprep.subr.mxu0 0.0
    %255 = vmatpush1.msra.mxu0 0.0
    %256 = vmatprep.subr.mxu0 0.0
    %257 = vmatpush1.msra.mxu0 0.0
    %258 = vmatprep.subr.mxu0 0.0
    %259 = vmatpush1.msra.mxu0 0.0
    %260 = vmatprep.subr.mxu0 0.0
    %261 = vmatpush1.msra.mxu0 0.0
    %262 = vmatprep.subr.mxu0 0.0
    %263 = vmatpush1.msra.mxu0 0.0
    %264 = vmatprep.subr.mxu0 0.0
    %265 = vmatpush1.msra.mxu0 0.0
    %266 = vmatprep.subr.mxu0 0.0
    %267 = vmatpush1.msra.mxu0 0.0
    %268 = vmatprep.subr.mxu0 0.0
    %269 = vmatpush1.msra.mxu0 0.0
    %270 = vmatprep.subr.mxu0 0.0
    %271 = vmatpush1.msra.mxu0 0.0
    %272 = vmatprep.subr.mxu0 0.0
    %273 = vmatpush1.msra.mxu0 %v228
    %274 = vmatprep.subr.mxu0 0.0
    %275 = vmatpush1.msra.mxu0 %v227
    %276 = vmatprep.subr.mxu0 0.0
    %277 = vmatpush1.msra.mxu0 %v226
    %278 = vmatprep.subr.mxu0 0.0
    %279 = vmatpush1.msra.mxu0 %v225
    %280 = vmatprep.subr.mxu0 0.0
    %281 = vmatpush2.msra.mxu0 0.0
    %282 = vmatprep.subr.mxu0 0.0
    %283 = vmatpush2.msra.mxu0 0.0
    %284 = vmatprep.subr.mxu0 0.0
    %285 = vmatpush2.msra.mxu0 0.0
    %286 = vmatprep.subr.mxu0 0.0
    %287 = vmatpush2.msra.mxu0 0.0
    %288 = vmatprep.subr.mxu0 0.0
    %289 = vmatpush2.msra.mxu0 0.0
    %290 = vmatprep.subr.mxu0 0.0
    %291 = vmatpush2.msra.mxu0 0.0
    %292 = vmatprep.subr.mxu0 0.0
    %293 = vmatpush2.msra.mxu0 0.0
    %294 = vmatprep.subr.mxu0 0.0
    %295 = vmatpush2.msra.mxu0 0.0
    %296 = vmatprep.subr.mxu0 0.0
    %297 = vmatpush2.msra.mxu0 0.0
    %298 = vmatprep.subr.mxu0 0.0
    %299 = vmatpush2.msra.mxu0 0.0
    %300 = vmatprep.subr.mxu0 0.0
    %301 = vmatpush2.msra.mxu0 0.0
    %302 = vmatprep.subr.mxu0 0.0
    %303 = vmatpush2.msra.mxu0 0.0
    %304 = vmatprep.subr.mxu0 0.0
    %305 = vmatpush2.msra.mxu0 0.0
    %306 = vmatprep.subr.mxu0 0.0
    %307 = vmatpush2.msra.mxu0 0.0
    %308 = vmatprep.subr.mxu0 0.0
    %309 = vmatpush2.msra.mxu0 0.0
    %310 = vmatprep.subr.mxu0 0.0
    %311 = vmatpush2.msra.mxu0 0.0
    %312 = vmatprep.mubr.f32.mxu0 0.0
    %313 = vmatmul.mubr.f32.gmra.mxu0 %v237
    %v314 = vpop.f32.mrf.mxu0
    %v315 = vadd.f32 %v234, %v314
    %v316 = vpop.f32.mrf.mxu0
    %317 = vmatprep.mubr.f32.mxu0 0.0
    %318 = vmatmul.mubr.f32.gmra.mxu0 %v240
    %v319 = vpop.f32.mrf.mxu0
    %v320 = vadd.f32 %v234, %v319
    %v321 = vpop.f32.mrf.mxu0
    %322 = vmatprep.mubr.f32.mxu0 0.0
    %323 = vmatmul.mubr.f32.gmra.mxu0 %v243
    %v324 = vpop.f32.mrf.mxu0
    %v325 = vadd.f32 %v234, %v324
    %v326 = vpop.f32.mrf.mxu0
    %327 = vmatprep.mubr.f32.mxu0 0.0
    %328 = vmatmul.mubr.f32.gmra.mxu0 %v246
    %v329 = vpop.f32.mrf.mxu0
    %v330 = vadd.f32 %v234, %v329
    %v331 = vpop.f32.mrf.mxu0
    %332 = vdwg.mxu0
    %335 = vrot.lane.b32.xlu0 %v207, 120
    %v336 = vpop.permute.xlu0 %335
    %337 = vrot.lane.b32.xlu0 %v212, 120
    %v338 = vpop.permute.xlu0 %337
    %339 = vrot.lane.b32.xlu0 %v207, 112
    %v340 = vpop.permute.xlu0 %339
    %341 = vrot.lane.b32.xlu0 %v212, 112
    %v342 = vpop.permute.xlu0 %341
    %343 = vrot.lane.b32.xlu0 %v207, 104
    %v344 = vpop.permute.xlu0 %343
    %345 = vrot.lane.b32.xlu0 %v212, 104
    %v346 = vpop.permute.xlu0 %345
    %349 = vrot.lane.b32.xlu0 %v217, 120
    %v350 = vpop.permute.xlu0 %349
    %351 = vrot.lane.b32.xlu0 %v222, 120
    %v352 = vpop.permute.xlu0 %351
    %353 = vrot.lane.b32.xlu0 %v217, 112
    %v354 = vpop.permute.xlu0 %353
    %355 = vrot.lane.b32.xlu0 %v222, 112
    %v356 = vpop.permute.xlu0 %355
    %357 = vrot.lane.b32.xlu0 %v217, 104
    %v358 = vpop.permute.xlu0 %357
    %359 = vrot.lane.b32.xlu0 %v222, 104
    %v360 = vpop.permute.xlu0 %359
    %363 = vrot.lane.b32.xlu0 %v315, 120
    %v364 = vpop.permute.xlu0 %363
    %365 = vrot.lane.b32.xlu0 %v320, 120
    %v366 = vpop.permute.xlu0 %365
    %369 = vrot.lane.b32.xlu0 %v315, 112
    %v370 = vpop.permute.xlu0 %369
    %371 = vrot.lane.b32.xlu0 %v320, 112
    %v372 = vpop.permute.xlu0 %371
    %375 = vrot.lane.b32.xlu0 %v315, 104
    %v376 = vpop.permute.xlu0 %375
    %377 = vrot.lane.b32.xlu0 %v320, 104
    %v378 = vpop.permute.xlu0 %377
    %383 = vrot.lane.b32.xlu0 %v325, 120
    %v384 = vpop.permute.xlu0 %383
    %385 = vrot.lane.b32.xlu0 %v330, 120
    %v386 = vpop.permute.xlu0 %385
    %389 = vrot.lane.b32.xlu0 %v325, 112
    %v390 = vpop.permute.xlu0 %389
    %391 = vrot.lane.b32.xlu0 %v330, 112
    %v392 = vpop.permute.xlu0 %391
    %395 = vrot.lane.b32.xlu0 %v325, 104
    %v396 = vpop.permute.xlu0 %395
    %397 = vrot.lane.b32.xlu0 %v330, 104
    %v398 = vpop.permute.xlu0 %397
    %401 = vrot.lane.b32.xlu0 %v207, 96
    %v402 = vpop.permute.xlu0 %401
    %403 = vrot.lane.b32.xlu0 %v212, 96
    %v404 = vpop.permute.xlu0 %403
    %vm405 = vcmask 64512
    %v406 = vsel %vm405, %v207, 0
    %v408 = vsel %vm405, %v212, 0
    %v410 = vsel %vm405, %v402, 0
    %v412 = vsel %vm405, %v404, 0
    %414 = vmatprep.subr.mxu0 0.0
    %415 = vmatpush1.xpose.msra.mxu0 0.0
    %416 = vmatprep.subr.mxu0 0.0
    %417 = vmatpush1.xpose.msra.mxu0 0.0
    %418 = vmatprep.subr.mxu0 0.0
    %419 = vmatpush1.xpose.msra.mxu0 0.0
    %420 = vmatprep.subr.mxu0 0.0
    %421 = vmatpush1.xpose.msra.mxu0 0.0
    %422 = vmatprep.subr.mxu0 0.0
    %423 = vmatpush1.xpose.msra.mxu0 0.0
    %424 = vmatprep.subr.mxu0 0.0
    %425 = vmatpush1.xpose.msra.mxu0 0.0
    %426 = vmatprep.subr.mxu0 0.0
    %427 = vmatpush1.xpose.msra.mxu0 0.0
    %428 = vmatprep.subr.mxu0 0.0
    %429 = vmatpush1.xpose.msra.mxu0 0.0
    %430 = vmatprep.subr.mxu0 0.0
    %431 = vmatpush1.xpose.msra.mxu0 0.0
    %432 = vmatprep.subr.mxu0 0.0
    %433 = vmatpush1.xpose.msra.mxu0 0.0
    %434 = vmatprep.subr.mxu0 0.0
    %435 = vmatpush1.xpose.msra.mxu0 0.0
    %436 = vmatprep.subr.mxu0 0.0
    %437 = vmatpush1.xpose.msra.mxu0 0.0
    %438 = vmatprep.subr.mxu0 0.0
    %439 = vmatpush1.xpose.msra.mxu0 0.0
    %440 = vmatprep.subr.mxu0 0.0
    %441 = vmatpush1.xpose.msra.mxu0 0.0
    %442 = vmatprep.subr.mxu0 0.0
    %443 = vmatpush1.xpose.msra.mxu0 %v412
    %444 = vmatprep.subr.mxu0 0.0
    %445 = vmatpush1.xpose.msra.mxu0 %v410
    %446 = vmatprep.subr.mxu0 0.0
    %447 = vmatpush2.xpose.msra.mxu0 0.0
    %448 = vmatprep.subr.mxu0 0.0
    %449 = vmatpush2.xpose.msra.mxu0 0.0
    %450 = vmatprep.subr.mxu0 0.0
    %451 = vmatpush2.xpose.msra.mxu0 0.0
    %452 = vmatprep.subr.mxu0 0.0
    %453 = vmatpush2.xpose.msra.mxu0 0.0
    %454 = vmatprep.subr.mxu0 0.0
    %455 = vmatpush2.xpose.msra.mxu0 0.0
    %456 = vmatprep.subr.mxu0 0.0
    %457 = vmatpush2.xpose.msra.mxu0 0.0
    %458 = vmatprep.subr.mxu0 0.0
    %459 = vmatpush2.xpose.msra.mxu0 0.0
    %460 = vmatprep.subr.mxu0 0.0
    %461 = vmatpush2.xpose.msra.mxu0 0.0
    %462 = vmatprep.subr.mxu0 0.0
    %463 = vmatpush2.xpose.msra.mxu0 0.0
    %464 = vmatprep.subr.mxu0 0.0
    %465 = vmatpush2.xpose.msra.mxu0 0.0
    %466 = vmatprep.subr.mxu0 0.0
    %467 = vmatpush2.xpose.msra.mxu0 0.0
    %468 = vmatprep.subr.mxu0 0.0
    %469 = vmatpush2.xpose.msra.mxu0 0.0
    %470 = vmatprep.subr.mxu0 0.0
    %471 = vmatpush2.xpose.msra.mxu0 0.0
    %472 = vmatprep.subr.mxu0 0.0
    %473 = vmatpush2.xpose.msra.mxu0 0.0
    %474 = vmatprep.subr.mxu0 0.0
    %475 = vmatpush2.xpose.msra.mxu0 0.0
    %476 = vmatprep.subr.mxu0 0.0
    %477 = vmatpush2.xpose.msra.mxu0 0.0
    %478 = vmatprep.mubr.f32.mxu0 0.0
    %479 = vmatmul.mubr.f32.gmra.mxu0 %v406
    %v480 = vpop.f32.mrf.mxu0
    %v481 = vadd.f32 0.0, %v480
    %v482 = vpop.f32.mrf.mxu0
    %483 = vmatprep.mubr.f32.mxu0 0.0
    %484 = vmatmul.mubr.f32.gmra.mxu0 %v408
    %v485 = vpop.f32.mrf.mxu0
    %v486 = vadd.f32 0.0, %v485
    %v487 = vpop.f32.mrf.mxu0
    %488 = vdwg.mxu0
    %489 = vrot.lane.b32.xlu0 %v336, 96
    %v490 = vpop.permute.xlu0 %489
    %491 = vrot.lane.b32.xlu0 %v338, 96
    %v492 = vpop.permute.xlu0 %491
    %v493 = vsel %vm405, %v336, 0
    %v495 = vsel %vm405, %v338, 0
    %v497 = vsel %vm405, %v490, 0
    %v499 = vsel %vm405, %v492, 0
    %501 = vmatprep.subr.mxu0 0.0
    %502 = vmatpush1.xpose.msra.mxu0 0.0
    %503 = vmatprep.subr.mxu0 0.0
    %504 = vmatpush1.xpose.msra.mxu0 0.0
    %505 = vmatprep.subr.mxu0 0.0
    %506 = vmatpush1.xpose.msra.mxu0 0.0
    %507 = vmatprep.subr.mxu0 0.0
    %508 = vmatpush1.xpose.msra.mxu0 0.0
    %509 = vmatprep.subr.mxu0 0.0
    %510 = vmatpush1.xpose.msra.mxu0 0.0
    %511 = vmatprep.subr.mxu0 0.0
    %512 = vmatpush1.xpose.msra.mxu0 0.0
    %513 = vmatprep.subr.mxu0 0.0
    %514 = vmatpush1.xpose.msra.mxu0 0.0
    %515 = vmatprep.subr.mxu0 0.0
    %516 = vmatpush1.xpose.msra.mxu0 0.0
    %517 = vmatprep.subr.mxu0 0.0
    %518 = vmatpush1.xpose.msra.mxu0 0.0
    %519 = vmatprep.subr.mxu0 0.0
    %520 = vmatpush1.xpose.msra.mxu0 0.0
    %521 = vmatprep.subr.mxu0 0.0
    %522 = vmatpush1.xpose.msra.mxu0 0.0
    %523 = vmatprep.subr.mxu0 0.0
    %524 = vmatpush1.xpose.msra.mxu0 0.0
    %525 = vmatprep.subr.mxu0 0.0
    %526 = vmatpush1.xpose.msra.mxu0 0.0
    %527 = vmatprep.subr.mxu0 0.0
    %528 = vmatpush1.xpose.msra.mxu0 0.0
    %529 = vmatprep.subr.mxu0 0.0
    %530 = vmatpush1.xpose.msra.mxu0 %v499
    %531 = vmatprep.subr.mxu0 0.0
    %532 = vmatpush1.xpose.msra.mxu0 %v497
    %533 = vmatprep.subr.mxu0 0.0
    %534 = vmatpush2.xpose.msra.mxu0 0.0
    %535 = vmatprep.subr.mxu0 0.0
    %536 = vmatpush2.xpose.msra.mxu0 0.0
    %537 = vmatprep.subr.mxu0 0.0
    %538 = vmatpush2.xpose.msra.mxu0 0.0
    %539 = vmatprep.subr.mxu0 0.0
    %540 = vmatpush2.xpose.msra.mxu0 0.0
    %541 = vmatprep.subr.mxu0 0.0
    %542 = vmatpush2.xpose.msra.mxu0 0.0
    %543 = vmatprep.subr.mxu0 0.0
    %544 = vmatpush2.xpose.msra.mxu0 0.0
    %545 = vmatprep.subr.mxu0 0.0
    %546 = vmatpush2.xpose.msra.mxu0 0.0
    %547 = vmatprep.subr.mxu0 0.0
    %548 = vmatpush2.xpose.msra.mxu0 0.0
    %549 = vmatprep.subr.mxu0 0.0
    %550 = vmatpush2.xpose.msra.mxu0 0.0
    %551 = vmatprep.subr.mxu0 0.0
    %552 = vmatpush2.xpose.msra.mxu0 0.0
    %553 = vmatprep.subr.mxu0 0.0
    %554 = vmatpush2.xpose.msra.mxu0 0.0
    %555 = vmatprep.subr.mxu0 0.0
    %556 = vmatpush2.xpose.msra.mxu0 0.0
    %557 = vmatprep.subr.mxu0 0.0
    %558 = vmatpush2.xpose.msra.mxu0 0.0
    %559 = vmatprep.subr.mxu0 0.0
    %560 = vmatpush2.xpose.msra.mxu0 0.0
    %561 = vmatprep.subr.mxu0 0.0
    %562 = vmatpush2.xpose.msra.mxu0 0.0
    %563 = vmatprep.subr.mxu0 0.0
    %564 = vmatpush2.xpose.msra.mxu0 0.0
    %565 = vmatprep.mubr.f32.mxu0 0.0
    %566 = vmatmul.mubr.f32.gmra.mxu0 %v493
    %v567 = vpop.f32.mrf.mxu0
    %v568 = vadd.f32 0.0, %v567
    %v569 = vpop.f32.mrf.mxu0
    %570 = vmatprep.mubr.f32.mxu0 0.0
    %571 = vmatmul.mubr.f32.gmra.mxu0 %v495
    %v572 = vpop.f32.mrf.mxu0
    %v573 = vadd.f32 0.0, %v572
    %v574 = vpop.f32.mrf.mxu0
    %575 = vdwg.mxu0
    %576 = vrot.lane.b32.xlu0 %v340, 96
    %v577 = vpop.permute.xlu0 %576
    %578 = vrot.lane.b32.xlu0 %v342, 96
    %v579 = vpop.permute.xlu0 %578
    %v580 = vsel %vm405, %v340, 0
    %v582 = vsel %vm405, %v342, 0
    %v584 = vsel %vm405, %v577, 0
    %v586 = vsel %vm405, %v579, 0
    %588 = vmatprep.subr.mxu0 0.0
    %589 = vmatpush1.xpose.msra.mxu0 0.0
    %590 = vmatprep.subr.mxu0 0.0
    %591 = vmatpush1.xpose.msra.mxu0 0.0
    %592 = vmatprep.subr.mxu0 0.0
    %593 = vmatpush1.xpose.msra.mxu0 0.0
    %594 = vmatprep.subr.mxu0 0.0
    %595 = vmatpush1.xpose.msra.mxu0 0.0
    %596 = vmatprep.subr.mxu0 0.0
    %597 = vmatpush1.xpose.msra.mxu0 0.0
    %598 = vmatprep.subr.mxu0 0.0
    %599 = vmatpush1.xpose.msra.mxu0 0.0
    %600 = vmatprep.subr.mxu0 0.0
    %601 = vmatpush1.xpose.msra.mxu0 0.0
    %602 = vmatprep.subr.mxu0 0.0
    %603 = vmatpush1.xpose.msra.mxu0 0.0
    %604 = vmatprep.subr.mxu0 0.0
    %605 = vmatpush1.xpose.msra.mxu0 0.0
    %606 = vmatprep.subr.mxu0 0.0
    %607 = vmatpush1.xpose.msra.mxu0 0.0
    %608 = vmatprep.subr.mxu0 0.0
    %609 = vmatpush1.xpose.msra.mxu0 0.0
    %610 = vmatprep.subr.mxu0 0.0
    %611 = vmatpush1.xpose.msra.mxu0 0.0
    %612 = vmatprep.subr.mxu0 0.0
    %613 = vmatpush1.xpose.msra.mxu0 0.0
    %614 = vmatprep.subr.mxu0 0.0
    %615 = vmatpush1.xpose.msra.mxu0 0.0
    %616 = vmatprep.subr.mxu0 0.0
    %617 = vmatpush1.xpose.msra.mxu0 %v586
    %618 = vmatprep.subr.mxu0 0.0
    %619 = vmatpush1.xpose.msra.mxu0 %v584
    %620 = vmatprep.subr.mxu0 0.0
    %621 = vmatpush2.xpose.msra.mxu0 0.0
    %622 = vmatprep.subr.mxu0 0.0
    %623 = vmatpush2.xpose.msra.mxu0 0.0
    %624 = vmatprep.subr.mxu0 0.0
    %625 = vmatpush2.xpose.msra.mxu0 0.0
    %626 = vmatprep.subr.mxu0 0.0
    %627 = vmatpush2.xpose.msra.mxu0 0.0
    %628 = vmatprep.subr.mxu0 0.0
    %629 = vmatpush2.xpose.msra.mxu0 0.0
    %630 = vmatprep.subr.mxu0 0.0
    %631 = vmatpush2.xpose.msra.mxu0 0.0
    %632 = vmatprep.subr.mxu0 0.0
    %633 = vmatpush2.xpose.msra.mxu0 0.0
    %634 = vmatprep.subr.mxu0 0.0
    %635 = vmatpush2.xpose.msra.mxu0 0.0
    %636 = vmatprep.subr.mxu0 0.0
    %637 = vmatpush2.xpose.msra.mxu0 0.0
    %638 = vmatprep.subr.mxu0 0.0
    %639 = vmatpush2.xpose.msra.mxu0 0.0
    %640 = vmatprep.subr.mxu0 0.0
    %641 = vmatpush2.xpose.msra.mxu0 0.0
    %642 = vmatprep.subr.mxu0 0.0
    %643 = vmatpush2.xpose.msra.mxu0 0.0
    %644 = vmatprep.subr.mxu0 0.0
    %645 = vmatpush2.xpose.msra.mxu0 0.0
    %646 = vmatprep.subr.mxu0 0.0
    %647 = vmatpush2.xpose.msra.mxu0 0.0
    %648 = vmatprep.subr.mxu0 0.0
    %649 = vmatpush2.xpose.msra.mxu0 0.0
    %650 = vmatprep.subr.mxu0 0.0
    %651 = vmatpush2.xpose.msra.mxu0 0.0
    %652 = vmatprep.mubr.f32.mxu0 0.0
    %653 = vmatmul.mubr.f32.gmra.mxu0 %v580
    %v654 = vpop.f32.mrf.mxu0
    %v655 = vadd.f32 0.0, %v654
    %v656 = vpop.f32.mrf.mxu0
    %657 = vmatprep.mubr.f32.mxu0 0.0
    %658 = vmatmul.mubr.f32.gmra.mxu0 %v582
    %v659 = vpop.f32.mrf.mxu0
    %v660 = vadd.f32 0.0, %v659
    %v661 = vpop.f32.mrf.mxu0
    %662 = vdwg.mxu0
    %663 = vrot.lane.b32.xlu0 %v344, 96
    %v664 = vpop.permute.xlu0 %663
    %665 = vrot.lane.b32.xlu0 %v346, 96
    %v666 = vpop.permute.xlu0 %665
    %v667 = vsel %vm405, %v344, 0
    %v669 = vsel %vm405, %v346, 0
    %v671 = vsel %vm405, %v664, 0
    %v673 = vsel %vm405, %v666, 0
    %675 = vmatprep.subr.mxu0 0.0
    %676 = vmatpush1.xpose.msra.mxu0 0.0
    %677 = vmatprep.subr.mxu0 0.0
    %678 = vmatpush1.xpose.msra.mxu0 0.0
    %679 = vmatprep.subr.mxu0 0.0
    %680 = vmatpush1.xpose.msra.mxu0 0.0
    %681 = vmatprep.subr.mxu0 0.0
    %682 = vmatpush1.xpose.msra.mxu0 0.0
    %683 = vmatprep.subr.mxu0 0.0
    %684 = vmatpush1.xpose.msra.mxu0 0.0
    %685 = vmatprep.subr.mxu0 0.0
    %686 = vmatpush1.xpose.msra.mxu0 0.0
    %687 = vmatprep.subr.mxu0 0.0
    %688 = vmatpush1.xpose.msra.mxu0 0.0
    %689 = vmatprep.subr.mxu0 0.0
    %690 = vmatpush1.xpose.msra.mxu0 0.0
    %691 = vmatprep.subr.mxu0 0.0
    %692 = vmatpush1.xpose.msra.mxu0 0.0
    %693 = vmatprep.subr.mxu0 0.0
    %694 = vmatpush1.xpose.msra.mxu0 0.0
    %695 = vmatprep.subr.mxu0 0.0
    %696 = vmatpush1.xpose.msra.mxu0 0.0
    %697 = vmatprep.subr.mxu0 0.0
    %698 = vmatpush1.xpose.msra.mxu0 0.0
    %699 = vmatprep.subr.mxu0 0.0
    %700 = vmatpush1.xpose.msra.mxu0 0.0
    %701 = vmatprep.subr.mxu0 0.0
    %702 = vmatpush1.xpose.msra.mxu0 0.0
    %703 = vmatprep.subr.mxu0 0.0
    %704 = vmatpush1.xpose.msra.mxu0 %v673
    %705 = vmatprep.subr.mxu0 0.0
    %706 = vmatpush1.xpose.msra.mxu0 %v671
    %707 = vmatprep.subr.mxu0 0.0
    %708 = vmatpush2.xpose.msra.mxu0 0.0
    %709 = vmatprep.subr.mxu0 0.0
    %710 = vmatpush2.xpose.msra.mxu0 0.0
    %711 = vmatprep.subr.mxu0 0.0
    %712 = vmatpush2.xpose.msra.mxu0 0.0
    %713 = vmatprep.subr.mxu0 0.0
    %714 = vmatpush2.xpose.msra.mxu0 0.0
    %715 = vmatprep.subr.mxu0 0.0
    %716 = vmatpush2.xpose.msra.mxu0 0.0
    %717 = vmatprep.subr.mxu0 0.0
    %718 = vmatpush2.xpose.msra.mxu0 0.0
    %719 = vmatprep.subr.mxu0 0.0
    %720 = vmatpush2.xpose.msra.mxu0 0.0
    %721 = vmatprep.subr.mxu0 0.0
    %722 = vmatpush2.xpose.msra.mxu0 0.0
    %723 = vmatprep.subr.mxu0 0.0
    %724 = vmatpush2.xpose.msra.mxu0 0.0
    %725 = vmatprep.subr.mxu0 0.0
    %726 = vmatpush2.xpose.msra.mxu0 0.0
    %727 = vmatprep.subr.mxu0 0.0
    %728 = vmatpush2.xpose.msra.mxu0 0.0
    %729 = vmatprep.subr.mxu0 0.0
    %730 = vmatpush2.xpose.msra.mxu0 0.0
    %731 = vmatprep.subr.mxu0 0.0
    %732 = vmatpush2.xpose.msra.mxu0 0.0
    %733 = vmatprep.subr.mxu0 0.0
    %734 = vmatpush2.xpose.msra.mxu0 0.0
    %735 = vmatprep.subr.mxu0 0.0
    %736 = vmatpush2.xpose.msra.mxu0 0.0
    %737 = vmatprep.subr.mxu0 0.0
    %738 = vmatpush2.xpose.msra.mxu0 0.0
    %739 = vmatprep.mubr.f32.mxu0 0.0
    %740 = vmatmul.mubr.f32.gmra.mxu0 %v667
    %v741 = vpop.f32.mrf.mxu0
    %v742 = vadd.f32 0.0, %v741
    %v743 = vpop.f32.mrf.mxu0
    %744 = vmatprep.mubr.f32.mxu0 0.0
    %745 = vmatmul.mubr.f32.gmra.mxu0 %v669
    %v746 = vpop.f32.mrf.mxu0
    %v747 = vadd.f32 0.0, %v746
    %v748 = vpop.f32.mrf.mxu0
    %749 = vdwg.mxu0
    %750 = vrot.lane.b32.xlu0 %v217, 96
    %v751 = vpop.permute.xlu0 %750
    %752 = vrot.lane.b32.xlu0 %v222, 96
    %v753 = vpop.permute.xlu0 %752
    %v754 = vsel %vm405, %v217, 0
    %v756 = vsel %vm405, %v222, 0
    %v758 = vsel %vm405, %v751, 0
    %v760 = vsel %vm405, %v753, 0
    %762 = vmatprep.subr.mxu0 0.0
    %763 = vmatpush1.xpose.msra.mxu0 0.0
    %764 = vmatprep.subr.mxu0 0.0
    %765 = vmatpush1.xpose.msra.mxu0 0.0
    %766 = vmatprep.subr.mxu0 0.0
    %767 = vmatpush1.xpose.msra.mxu0 0.0
    %768 = vmatprep.subr.mxu0 0.0
    %769 = vmatpush1.xpose.msra.mxu0 0.0
    %770 = vmatprep.subr.mxu0 0.0
    %771 = vmatpush1.xpose.msra.mxu0 0.0
    %772 = vmatprep.subr.mxu0 0.0
    %773 = vmatpush1.xpose.msra.mxu0 0.0
    %774 = vmatprep.subr.mxu0 0.0
    %775 = vmatpush1.xpose.msra.mxu0 0.0
    %776 = vmatprep.subr.mxu0 0.0
    %777 = vmatpush1.xpose.msra.mxu0 0.0
    %778 = vmatprep.subr.mxu0 0.0
    %779 = vmatpush1.xpose.msra.mxu0 0.0
    %780 = vmatprep.subr.mxu0 0.0
    %781 = vmatpush1.xpose.msra.mxu0 0.0
    %782 = vmatprep.subr.mxu0 0.0
    %783 = vmatpush1.xpose.msra.mxu0 0.0
    %784 = vmatprep.subr.mxu0 0.0
    %785 = vmatpush1.xpose.msra.mxu0 0.0
    %786 = vmatprep.subr.mxu0 0.0
    %787 = vmatpush1.xpose.msra.mxu0 0.0
    %788 = vmatprep.subr.mxu0 0.0
    %789 = vmatpush1.xpose.msra.mxu0 0.0
    %790 = vmatprep.subr.mxu0 0.0
    %791 = vmatpush1.xpose.msra.mxu0 %v760
    %792 = vmatprep.subr.mxu0 0.0
    %793 = vmatpush1.xpose.msra.mxu0 %v758
    %794 = vmatprep.subr.mxu0 0.0
    %795 = vmatpush2.xpose.msra.mxu0 0.0
    %796 = vmatprep.subr.mxu0 0.0
    %797 = vmatpush2.xpose.msra.mxu0 0.0
    %798 = vmatprep.subr.mxu0 0.0
    %799 = vmatpush2.xpose.msra.mxu0 0.0
    %800 = vmatprep.subr.mxu0 0.0
    %801 = vmatpush2.xpose.msra.mxu0 0.0
    %802 = vmatprep.subr.mxu0 0.0
    %803 = vmatpush2.xpose.msra.mxu0 0.0
    %804 = vmatprep.subr.mxu0 0.0
    %805 = vmatpush2.xpose.msra.mxu0 0.0
    %806 = vmatprep.subr.mxu0 0.0
    %807 = vmatpush2.xpose.msra.mxu0 0.0
    %808 = vmatprep.subr.mxu0 0.0
    %809 = vmatpush2.xpose.msra.mxu0 0.0
    %810 = vmatprep.subr.mxu0 0.0
    %811 = vmatpush2.xpose.msra.mxu0 0.0
    %812 = vmatprep.subr.mxu0 0.0
    %813 = vmatpush2.xpose.msra.mxu0 0.0
    %814 = vmatprep.subr.mxu0 0.0
    %815 = vmatpush2.xpose.msra.mxu0 0.0
    %816 = vmatprep.subr.mxu0 0.0
    %817 = vmatpush2.xpose.msra.mxu0 0.0
    %818 = vmatprep.subr.mxu0 0.0
    %819 = vmatpush2.xpose.msra.mxu0 0.0
    %820 = vmatprep.subr.mxu0 0.0
    %821 = vmatpush2.xpose.msra.mxu0 0.0
    %822 = vmatprep.subr.mxu0 0.0
    %823 = vmatpush2.xpose.msra.mxu0 0.0
    %824 = vmatprep.subr.mxu0 0.0
    %825 = vmatpush2.xpose.msra.mxu0 0.0
    %826 = vmatprep.mubr.f32.mxu0 0.0
    %827 = vmatmul.mubr.f32.gmra.mxu0 %v754
    %v828 = vpop.f32.mrf.mxu0
    %v829 = vadd.f32 0.0, %v828
    %v830 = vpop.f32.mrf.mxu0
    %831 = vmatprep.mubr.f32.mxu0 0.0
    %832 = vmatmul.mubr.f32.gmra.mxu0 %v756
    %v833 = vpop.f32.mrf.mxu0
    %v834 = vadd.f32 0.0, %v833
    %v835 = vpop.f32.mrf.mxu0
    %836 = vdwg.mxu0
    %837 = vrot.lane.b32.xlu0 %v350, 96
    %v838 = vpop.permute.xlu0 %837
    %839 = vrot.lane.b32.xlu0 %v352, 96
    %v840 = vpop.permute.xlu0 %839
    %v841 = vsel %vm405, %v350, 0
    %v843 = vsel %vm405, %v352, 0
    %v845 = vsel %vm405, %v838, 0
    %v847 = vsel %vm405, %v840, 0
    %849 = vmatprep.subr.mxu0 0.0
    %850 = vmatpush1.xpose.msra.mxu0 0.0
    %851 = vmatprep.subr.mxu0 0.0
    %852 = vmatpush1.xpose.msra.mxu0 0.0
    %853 = vmatprep.subr.mxu0 0.0
    %854 = vmatpush1.xpose.msra.mxu0 0.0
    %855 = vmatprep.subr.mxu0 0.0
    %856 = vmatpush1.xpose.msra.mxu0 0.0
    %857 = vmatprep.subr.mxu0 0.0
    %858 = vmatpush1.xpose.msra.mxu0 0.0
    %859 = vmatprep.subr.mxu0 0.0
    %860 = vmatpush1.xpose.msra.mxu0 0.0
    %861 = vmatprep.subr.mxu0 0.0
    %862 = vmatpush1.xpose.msra.mxu0 0.0
    %863 = vmatprep.subr.mxu0 0.0
    %864 = vmatpush1.xpose.msra.mxu0 0.0
    %865 = vmatprep.subr.mxu0 0.0
    %866 = vmatpush1.xpose.msra.mxu0 0.0
    %867 = vmatprep.subr.mxu0 0.0
    %868 = vmatpush1.xpose.msra.mxu0 0.0
    %869 = vmatprep.subr.mxu0 0.0
    %870 = vmatpush1.xpose.msra.mxu0 0.0
    %871 = vmatprep.subr.mxu0 0.0
    %872 = vmatpush1.xpose.msra.mxu0 0.0
    %873 = vmatprep.subr.mxu0 0.0
    %874 = vmatpush1.xpose.msra.mxu0 0.0
    %875 = vmatprep.subr.mxu0 0.0
    %876 = vmatpush1.xpose.msra.mxu0 0.0
    %877 = vmatprep.subr.mxu0 0.0
    %878 = vmatpush1.xpose.msra.mxu0 %v847
    %879 = vmatprep.subr.mxu0 0.0
    %880 = vmatpush1.xpose.msra.mxu0 %v845
    %881 = vmatprep.subr.mxu0 0.0
    %882 = vmatpush2.xpose.msra.mxu0 0.0
    %883 = vmatprep.subr.mxu0 0.0
    %884 = vmatpush2.xpose.msra.mxu0 0.0
    %885 = vmatprep.subr.mxu0 0.0
    %886 = vmatpush2.xpose.msra.mxu0 0.0
    %887 = vmatprep.subr.mxu0 0.0
    %888 = vmatpush2.xpose.msra.mxu0 0.0
    %889 = vmatprep.subr.mxu0 0.0
    %890 = vmatpush2.xpose.msra.mxu0 0.0
    %891 = vmatprep.subr.mxu0 0.0
    %892 = vmatpush2.xpose.msra.mxu0 0.0
    %893 = vmatprep.subr.mxu0 0.0
    %894 = vmatpush2.xpose.msra.mxu0 0.0
    %895 = vmatprep.subr.mxu0 0.0
    %896 = vmatpush2.xpose.msra.mxu0 0.0
    %897 = vmatprep.subr.mxu0 0.0
    %898 = vmatpush2.xpose.msra.mxu0 0.0
    %899 = vmatprep.subr.mxu0 0.0
    %900 = vmatpush2.xpose.msra.mxu0 0.0
    %901 = vmatprep.subr.mxu0 0.0
    %902 = vmatpush2.xpose.msra.mxu0 0.0
    %903 = vmatprep.subr.mxu0 0.0
    %904 = vmatpush2.xpose.msra.mxu0 0.0
    %905 = vmatprep.subr.mxu0 0.0
    %906 = vmatpush2.xpose.msra.mxu0 0.0
    %907 = vmatprep.subr.mxu0 0.0
    %908 = vmatpush2.xpose.msra.mxu0 0.0
    %909 = vmatprep.subr.mxu0 0.0
    %910 = vmatpush2.xpose.msra.mxu0 0.0
    %911 = vmatprep.subr.mxu0 0.0
    %912 = vmatpush2.xpose.msra.mxu0 0.0
    %913 = vmatprep.mubr.f32.mxu0 0.0
    %914 = vmatmul.mubr.f32.gmra.mxu0 %v841
    %v915 = vpop.f32.mrf.mxu0
    %v916 = vadd.f32 0.0, %v915
    %v917 = vpop.f32.mrf.mxu0
    %918 = vmatprep.mubr.f32.mxu0 0.0
    %919 = vmatmul.mubr.f32.gmra.mxu0 %v843
    %v920 = vpop.f32.mrf.mxu0
    %v921 = vadd.f32 0.0, %v920
    %v922 = vpop.f32.mrf.mxu0
    %923 = vdwg.mxu0
    %924 = vrot.lane.b32.xlu0 %v354, 96
    %v925 = vpop.permute.xlu0 %924
    %926 = vrot.lane.b32.xlu0 %v356, 96
    %v927 = vpop.permute.xlu0 %926
    %v928 = vsel %vm405, %v354, 0
    %v930 = vsel %vm405, %v356, 0
    %v932 = vsel %vm405, %v925, 0
    %v934 = vsel %vm405, %v927, 0
    %936 = vmatprep.subr.mxu0 0.0
    %937 = vmatpush1.xpose.msra.mxu0 0.0
    %938 = vmatprep.subr.mxu0 0.0
    %939 = vmatpush1.xpose.msra.mxu0 0.0
    %940 = vmatprep.subr.mxu0 0.0
    %941 = vmatpush1.xpose.msra.mxu0 0.0
    %942 = vmatprep.subr.mxu0 0.0
    %943 = vmatpush1.xpose.msra.mxu0 0.0
    %944 = vmatprep.subr.mxu0 0.0
    %945 = vmatpush1.xpose.msra.mxu0 0.0
    %946 = vmatprep.subr.mxu0 0.0
    %947 = vmatpush1.xpose.msra.mxu0 0.0
    %948 = vmatprep.subr.mxu0 0.0
    %949 = vmatpush1.xpose.msra.mxu0 0.0
    %950 = vmatprep.subr.mxu0 0.0
    %951 = vmatpush1.xpose.msra.mxu0 0.0
    %952 = vmatprep.subr.mxu0 0.0
    %953 = vmatpush1.xpose.msra.mxu0 0.0
    %954 = vmatprep.subr.mxu0 0.0
    %955 = vmatpush1.xpose.msra.mxu0 0.0
    %956 = vmatprep.subr.mxu0 0.0
    %957 = vmatpush1.xpose.msra.mxu0 0.0
    %958 = vmatprep.subr.mxu0 0.0
    %959 = vmatpush1.xpose.msra.mxu0 0.0
    %960 = vmatprep.subr.mxu0 0.0
    %961 = vmatpush1.xpose.msra.mxu0 0.0
    %962 = vmatprep.subr.mxu0 0.0
    %963 = vmatpush1.xpose.msra.mxu0 0.0
    %964 = vmatprep.subr.mxu0 0.0
    %965 = vmatpush1.xpose.msra.mxu0 %v934
    %966 = vmatprep.subr.mxu0 0.0
    %967 = vmatpush1.xpose.msra.mxu0 %v932
    %968 = vmatprep.subr.mxu0 0.0
    %969 = vmatpush2.xpose.msra.mxu0 0.0
    %970 = vmatprep.subr.mxu0 0.0
    %971 = vmatpush2.xpose.msra.mxu0 0.0
    %972 = vmatprep.subr.mxu0 0.0
    %973 = vmatpush2.xpose.msra.mxu0 0.0
    %974 = vmatprep.subr.mxu0 0.0
    %975 = vmatpush2.xpose.msra.mxu0 0.0
    %976 = vmatprep.subr.mxu0 0.0
    %977 = vmatpush2.xpose.msra.mxu0 0.0
    %978 = vmatprep.subr.mxu0 0.0
    %979 = vmatpush2.xpose.msra.mxu0 0.0
    %980 = vmatprep.subr.mxu0 0.0
    %981 = vmatpush2.xpose.msra.mxu0 0.0
    %982 = vmatprep.subr.mxu0 0.0
    %983 = vmatpush2.xpose.msra.mxu0 0.0
    %984 = vmatprep.subr.mxu0 0.0
    %985 = vmatpush2.xpose.msra.mxu0 0.0
    %986 = vmatprep.subr.mxu0 0.0
    %987 = vmatpush2.xpose.msra.mxu0 0.0
    %988 = vmatprep.subr.mxu0 0.0
    %989 = vmatpush2.xpose.msra.mxu0 0.0
    %990 = vmatprep.subr.mxu0 0.0
    %991 = vmatpush2.xpose.msra.mxu0 0.0
    %992 = vmatprep.subr.mxu0 0.0
    %993 = vmatpush2.xpose.msra.mxu0 0.0
    %994 = vmatprep.subr.mxu0 0.0
    %995 = vmatpush2.xpose.msra.mxu0 0.0
    %996 = vmatprep.subr.mxu0 0.0
    %997 = vmatpush2.xpose.msra.mxu0 0.0
    %998 = vmatprep.subr.mxu0 0.0
    %999 = vmatpush2.xpose.msra.mxu0 0.0
    %1000 = vmatprep.mubr.f32.mxu0 0.0
    %1001 = vmatmul.mubr.f32.gmra.mxu0 %v928
    %v1002 = vpop.f32.mrf.mxu0
    %v1003 = vadd.f32 0.0, %v1002
    %v1004 = vpop.f32.mrf.mxu0
    %1005 = vmatprep.mubr.f32.mxu0 0.0
    %1006 = vmatmul.mubr.f32.gmra.mxu0 %v930
    %v1007 = vpop.f32.mrf.mxu0
    %v1008 = vadd.f32 0.0, %v1007
    %v1009 = vpop.f32.mrf.mxu0
    %1010 = vdwg.mxu0
    %1011 = vrot.lane.b32.xlu0 %v358, 96
    %v1012 = vpop.permute.xlu0 %1011
    %1013 = vrot.lane.b32.xlu0 %v360, 96
    %v1014 = vpop.permute.xlu0 %1013
    %v1015 = vsel %vm405, %v358, 0
    %v1017 = vsel %vm405, %v360, 0
    %v1019 = vsel %vm405, %v1012, 0
    %v1021 = vsel %vm405, %v1014, 0
    %1023 = vmatprep.subr.mxu0 0.0
    %1024 = vmatpush1.xpose.msra.mxu0 0.0
    %1025 = vmatprep.subr.mxu0 0.0
    %1026 = vmatpush1.xpose.msra.mxu0 0.0
    %1027 = vmatprep.subr.mxu0 0.0
    %1028 = vmatpush1.xpose.msra.mxu0 0.0
    %1029 = vmatprep.subr.mxu0 0.0
    %1030 = vmatpush1.xpose.msra.mxu0 0.0
    %1031 = vmatprep.subr.mxu0 0.0
    %1032 = vmatpush1.xpose.msra.mxu0 0.0
    %1033 = vmatprep.subr.mxu0 0.0
    %1034 = vmatpush1.xpose.msra.mxu0 0.0
    %1035 = vmatprep.subr.mxu0 0.0
    %1036 = vmatpush1.xpose.msra.mxu0 0.0
    %1037 = vmatprep.subr.mxu0 0.0
    %1038 = vmatpush1.xpose.msra.mxu0 0.0
    %1039 = vmatprep.subr.mxu0 0.0
    %1040 = vmatpush1.xpose.msra.mxu0 0.0
    %1041 = vmatprep.subr.mxu0 0.0
    %1042 = vmatpush1.xpose.msra.mxu0 0.0
    %1043 = vmatprep.subr.mxu0 0.0
    %1044 = vmatpush1.xpose.msra.mxu0 0.0
    %1045 = vmatprep.subr.mxu0 0.0
    %1046 = vmatpush1.xpose.msra.mxu0 0.0
    %1047 = vmatprep.subr.mxu0 0.0
    %1048 = vmatpush1.xpose.msra.mxu0 0.0
    %1049 = vmatprep.subr.mxu0 0.0
    %1050 = vmatpush1.xpose.msra.mxu0 0.0
    %1051 = vmatprep.subr.mxu0 0.0
    %1052 = vmatpush1.xpose.msra.mxu0 %v1021
    %1053 = vmatprep.subr.mxu0 0.0
    %1054 = vmatpush1.xpose.msra.mxu0 %v1019
    %1055 = vmatprep.subr.mxu0 0.0
    %1056 = vmatpush2.xpose.msra.mxu0 0.0
    %1057 = vmatprep.subr.mxu0 0.0
    %1058 = vmatpush2.xpose.msra.mxu0 0.0
    %1059 = vmatprep.subr.mxu0 0.0
    %1060 = vmatpush2.xpose.msra.mxu0 0.0
    %1061 = vmatprep.subr.mxu0 0.0
    %1062 = vmatpush2.xpose.msra.mxu0 0.0
    %1063 = vmatprep.subr.mxu0 0.0
    %1064 = vmatpush2.xpose.msra.mxu0 0.0
    %1065 = vmatprep.subr.mxu0 0.0
    %1066 = vmatpush2.xpose.msra.mxu0 0.0
    %1067 = vmatprep.subr.mxu0 0.0
    %1068 = vmatpush2.xpose.msra.mxu0 0.0
    %1069 = vmatprep.subr.mxu0 0.0
    %1070 = vmatpush2.xpose.msra.mxu0 0.0
    %1071 = vmatprep.subr.mxu0 0.0
    %1072 = vmatpush2.xpose.msra.mxu0 0.0
    %1073 = vmatprep.subr.mxu0 0.0
    %1074 = vmatpush2.xpose.msra.mxu0 0.0
    %1075 = vmatprep.subr.mxu0 0.0
    %1076 = vmatpush2.xpose.msra.mxu0 0.0
    %1077 = vmatprep.subr.mxu0 0.0
    %1078 = vmatpush2.xpose.msra.mxu0 0.0
    %1079 = vmatprep.subr.mxu0 0.0
    %1080 = vmatpush2.xpose.msra.mxu0 0.0
    %1081 = vmatprep.subr.mxu0 0.0
    %1082 = vmatpush2.xpose.msra.mxu0 0.0
    %1083 = vmatprep.subr.mxu0 0.0
    %1084 = vmatpush2.xpose.msra.mxu0 0.0
    %1085 = vmatprep.subr.mxu0 0.0
    %1086 = vmatpush2.xpose.msra.mxu0 0.0
    %1087 = vmatprep.mubr.f32.mxu0 0.0
    %1088 = vmatmul.mubr.f32.gmra.mxu0 %v1015
    %v1089 = vpop.f32.mrf.mxu0
    %v1090 = vadd.f32 0.0, %v1089
    %v1091 = vpop.f32.mrf.mxu0
    %1092 = vmatprep.mubr.f32.mxu0 0.0
    %1093 = vmatmul.mubr.f32.gmra.mxu0 %v1017
    %v1094 = vpop.f32.mrf.mxu0
    %v1095 = vadd.f32 0.0, %v1094
    %v1096 = vpop.f32.mrf.mxu0
    %1097 = vdwg.mxu0
    %vm1098 = vcmask 130048
    %v1099 = vsel %vm1098, %v481, -inf
    %1100 = vmax.xlane.f32.xlu0 %v1099
    %v1101 = vpop.xlane.xlu0 %1100
    %v1102 = vsel %vm1098, %v486, -inf
    %1103 = vmax.xlane.f32.xlu0 %v1102
    %v1104 = vpop.xlane.xlu0 %1103
    %v1105 = vsel %vm1098, %v568, -inf
    %1106 = vmax.xlane.f32.xlu0 %v1105
    %v1107 = vpop.xlane.xlu0 %1106
    %v1108 = vsel %vm1098, %v573, -inf
    %1109 = vmax.xlane.f32.xlu0 %v1108
    %v1110 = vpop.xlane.xlu0 %1109
    %v1111 = vsel %vm1098, %v655, -inf
    %1112 = vmax.xlane.f32.xlu0 %v1111
    %v1113 = vpop.xlane.xlu0 %1112
    %v1114 = vsel %vm1098, %v660, -inf
    %1115 = vmax.xlane.f32.xlu0 %v1114
    %v1116 = vpop.xlane.xlu0 %1115
    %v1117 = vsel %vm1098, %v742, -inf
    %1118 = vmax.xlane.f32.xlu0 %v1117
    %v1119 = vpop.xlane.xlu0 %1118
    %v1120 = vsel %vm1098, %v747, -inf
    %1121 = vmax.xlane.f32.xlu0 %v1120
    %v1122 = vpop.xlane.xlu0 %1121
    %v1123 = vsel %vm1098, %v829, -inf
    %1124 = vmax.xlane.f32.xlu0 %v1123
    %v1125 = vpop.xlane.xlu0 %1124
    %v1126 = vsel %vm1098, %v834, -inf
    %1127 = vmax.xlane.f32.xlu0 %v1126
    %v1128 = vpop.xlane.xlu0 %1127
    %v1129 = vsel %vm1098, %v916, -inf
    %1130 = vmax.xlane.f32.xlu0 %v1129
    %v1131 = vpop.xlane.xlu0 %1130
    %v1132 = vsel %vm1098, %v921, -inf
    %1133 = vmax.xlane.f32.xlu0 %v1132
    %v1134 = vpop.xlane.xlu0 %1133
    %v1135 = vsel %vm1098, %v1003, -inf
    %1136 = vmax.xlane.f32.xlu0 %v1135
    %v1137 = vpop.xlane.xlu0 %1136
    %v1138 = vsel %vm1098, %v1008, -inf
    %1139 = vmax.xlane.f32.xlu0 %v1138
    %v1140 = vpop.xlane.xlu0 %1139
    %v1141 = vsel %vm1098, %v1090, -inf
    %1142 = vmax.xlane.f32.xlu0 %v1141
    %v1143 = vpop.xlane.xlu0 %1142
    %v1144 = vsel %vm1098, %v1095, -inf
    %1145 = vmax.xlane.f32.xlu0 %v1144
    %v1146 = vpop.xlane.xlu0 %1145
    %v1147 = vsub.f32 %v481, %v1101
    %v1148 = vsub.f32 %v486, %v1104
    %v1149 = vsub.f32 %v568, %v1107
    %v1150 = vsub.f32 %v573, %v1110
    %v1151 = vsub.f32 %v655, %v1113
    %v1152 = vsub.f32 %v660, %v1116
    %v1153 = vsub.f32 %v742, %v1119
    %v1154 = vsub.f32 %v747, %v1122
    %v1155 = vsub.f32 %v829, %v1125
    %v1156 = vsub.f32 %v834, %v1128
    %v1157 = vsub.f32 %v916, %v1131
    %v1158 = vsub.f32 %v921, %v1134
    %v1159 = vsub.f32 %v1003, %v1137
    %v1160 = vsub.f32 %v1008, %v1140
    %v1161 = vsub.f32 %v1090, %v1143
    %v1162 = vsub.f32 %v1095, %v1146
    %v1163 = vmul.f32 %v1147, 1.442695
    %v1164 = vpow.pop %v1163
    %v1165 = vmul.f32 %v1148, 1.442695
    %v1166 = vpow.pop %v1165
    %v1167 = vmul.f32 %v1149, 1.442695
    %v1168 = vpow.pop %v1167
    %v1169 = vmul.f32 %v1150, 1.442695
    %v1170 = vpow.pop %v1169
    %v1171 = vmul.f32 %v1151, 1.442695
    %v1172 = vpow.pop %v1171
    %v1173 = vmul.f32 %v1152, 1.442695
    %v1174 = vpow.pop %v1173
    %v1175 = vmul.f32 %v1153, 1.442695
    %v1176 = vpow.pop %v1175
    %v1177 = vmul.f32 %v1154, 1.442695
    %v1178 = vpow.pop %v1177
    %v1179 = vmul.f32 %v1155, 1.442695
    %v1180 = vpow.pop %v1179
    %v1181 = vmul.f32 %v1156, 1.442695
    %v1182 = vpow.pop %v1181
    %v1183 = vmul.f32 %v1157, 1.442695
    %v1184 = vpow.pop %v1183
    %v1185 = vmul.f32 %v1158, 1.442695
    %v1186 = vpow.pop %v1185
    %v1187 = vmul.f32 %v1159, 1.442695
    %v1188 = vpow.pop %v1187
    %v1189 = vmul.f32 %v1160, 1.442695
    %v1190 = vpow.pop %v1189
    %v1191 = vmul.f32 %v1161, 1.442695
    %v1192 = vpow.pop %v1191
    %v1193 = vmul.f32 %v1162, 1.442695
    %v1194 = vpow.pop %v1193
    %v1195 = vsel %vm1098, %v1164, 0.0
    %1196 = vadd.xlane.f32.xlu0 %v1195
    %v1197 = vpop.xlane.xlu0 %1196
    %v1198 = vsel %vm1098, %v1166, 0.0
    %1199 = vadd.xlane.f32.xlu0 %v1198
    %v1200 = vpop.xlane.xlu0 %1199
    %v1201 = vsel %vm1098, %v1168, 0.0
    %1202 = vadd.xlane.f32.xlu0 %v1201
    %v1203 = vpop.xlane.xlu0 %1202
    %v1204 = vsel %vm1098, %v1170, 0.0
    %1205 = vadd.xlane.f32.xlu0 %v1204
    %v1206 = vpop.xlane.xlu0 %1205
    %v1207 = vsel %vm1098, %v1172, 0.0
    %1208 = vadd.xlane.f32.xlu0 %v1207
    %v1209 = vpop.xlane.xlu0 %1208
    %v1210 = vsel %vm1098, %v1174, 0.0
    %1211 = vadd.xlane.f32.xlu0 %v1210
    %v1212 = vpop.xlane.xlu0 %1211
    %v1213 = vsel %vm1098, %v1176, 0.0
    %1214 = vadd.xlane.f32.xlu0 %v1213
    %v1215 = vpop.xlane.xlu0 %1214
    %v1216 = vsel %vm1098, %v1178, 0.0
    %1217 = vadd.xlane.f32.xlu0 %v1216
    %v1218 = vpop.xlane.xlu0 %1217
    %v1219 = vsel %vm1098, %v1180, 0.0
    %1220 = vadd.xlane.f32.xlu0 %v1219
    %v1221 = vpop.xlane.xlu0 %1220
    %v1222 = vsel %vm1098, %v1182, 0.0
    %1223 = vadd.xlane.f32.xlu0 %v1222
    %v1224 = vpop.xlane.xlu0 %1223
    %v1225 = vsel %vm1098, %v1184, 0.0
    %1226 = vadd.xlane.f32.xlu0 %v1225
    %v1227 = vpop.xlane.xlu0 %1226
    %v1228 = vsel %vm1098, %v1186, 0.0
    %1229 = vadd.xlane.f32.xlu0 %v1228
    %v1230 = vpop.xlane.xlu0 %1229
    %v1231 = vsel %vm1098, %v1188, 0.0
    %1232 = vadd.xlane.f32.xlu0 %v1231
    %v1233 = vpop.xlane.xlu0 %1232
    %v1234 = vsel %vm1098, %v1190, 0.0
    %1235 = vadd.xlane.f32.xlu0 %v1234
    %v1236 = vpop.xlane.xlu0 %1235
    %v1237 = vsel %vm1098, %v1192, 0.0
    %1238 = vadd.xlane.f32.xlu0 %v1237
    %v1239 = vpop.xlane.xlu0 %1238
    %v1240 = vsel %vm1098, %v1194, 0.0
    %1241 = vadd.xlane.f32.xlu0 %v1240
    %v1242 = vpop.xlane.xlu0 %1241
    %v1243 = vrcp.pop %v1197
    %v1244 = vmul.f32 1.0, %v1243
    %v1245 = vrcp.pop %v1200
    %v1246 = vmul.f32 1.0, %v1245
    %v1247 = vrcp.pop %v1203
    %v1248 = vmul.f32 1.0, %v1247
    %v1249 = vrcp.pop %v1206
    %v1250 = vmul.f32 1.0, %v1249
    %v1251 = vrcp.pop %v1209
    %v1252 = vmul.f32 1.0, %v1251
    %v1253 = vrcp.pop %v1212
    %v1254 = vmul.f32 1.0, %v1253
    %v1255 = vrcp.pop %v1215
    %v1256 = vmul.f32 1.0, %v1255
    %v1257 = vrcp.pop %v1218
    %v1258 = vmul.f32 1.0, %v1257
    %v1259 = vrcp.pop %v1221
    %v1260 = vmul.f32 1.0, %v1259
    %v1261 = vrcp.pop %v1224
    %v1262 = vmul.f32 1.0, %v1261
    %v1263 = vrcp.pop %v1227
    %v1264 = vmul.f32 1.0, %v1263
    %v1265 = vrcp.pop %v1230
    %v1266 = vmul.f32 1.0, %v1265
    %v1267 = vrcp.pop %v1233
    %v1268 = vmul.f32 1.0, %v1267
    %v1269 = vrcp.pop %v1236
    %v1270 = vmul.f32 1.0, %v1269
    %v1271 = vrcp.pop %v1239
    %v1272 = vmul.f32 1.0, %v1271
    %v1273 = vrcp.pop %v1242
    %v1274 = vmul.f32 1.0, %v1273
    %v1275 = vmul.f32 %v1164, %v1244
    %v1276 = vmul.f32 %v1166, %v1246
    %v1277 = vmul.f32 %v1168, %v1248
    %v1278 = vmul.f32 %v1170, %v1250
    %v1279 = vmul.f32 %v1172, %v1252
    %v1280 = vmul.f32 %v1174, %v1254
    %v1281 = vmul.f32 %v1176, %v1256
    %v1282 = vmul.f32 %v1178, %v1258
    %v1283 = vmul.f32 %v1180, %v1260
    %v1284 = vmul.f32 %v1182, %v1262
    %v1285 = vmul.f32 %v1184, %v1264
    %v1286 = vmul.f32 %v1186, %v1266
    %v1287 = vmul.f32 %v1188, %v1268
    %v1288 = vmul.f32 %v1190, %v1270
    %v1289 = vmul.f32 %v1192, %v1272
    %v1290 = vmul.f32 %v1194, %v1274
    %v1292 = vsel %vm1098, %v1275, 0
    %v1295 = vsel %vm1098, %v1276, 0
    %1297 = vmatprep.subr.mxu0 0.0
    %1298 = vmatpush1.msra.mxu0 0.0
    %1299 = vmatprep.subr.mxu0 0.0
    %1300 = vmatpush1.msra.mxu0 0.0
    %1301 = vmatprep.subr.mxu0 0.0
    %1302 = vmatpush1.msra.mxu0 0.0
    %1303 = vmatprep.subr.mxu0 0.0
    %1304 = vmatpush1.msra.mxu0 0.0
    %1305 = vmatprep.subr.mxu0 0.0
    %1306 = vmatpush1.msra.mxu0 0.0
    %1307 = vmatprep.subr.mxu0 0.0
    %1308 = vmatpush1.msra.mxu0 0.0
    %1309 = vmatprep.subr.mxu0 0.0
    %1310 = vmatpush1.msra.mxu0 0.0
    %1311 = vmatprep.subr.mxu0 0.0
    %1312 = vmatpush1.msra.mxu0 0.0
    %1313 = vmatprep.subr.mxu0 0.0
    %1314 = vmatpush1.msra.mxu0 0.0
    %1315 = vmatprep.subr.mxu0 0.0
    %1316 = vmatpush1.msra.mxu0 0.0
    %1317 = vmatprep.subr.mxu0 0.0
    %1318 = vmatpush1.msra.mxu0 0.0
    %1319 = vmatprep.subr.mxu0 0.0
    %1320 = vmatpush1.msra.mxu0 0.0
    %1321 = vmatprep.subr.mxu0 0.0
    %1322 = vmatpush1.msra.mxu0 0.0
    %1323 = vmatprep.subr.mxu0 0.0
    %1324 = vmatpush1.msra.mxu0 0.0
    %1325 = vmatprep.subr.mxu0 0.0
    %1326 = vmatpush1.msra.mxu0 %v320
    %1327 = vmatprep.subr.mxu0 0.0
    %1328 = vmatpush1.msra.mxu0 %v315
    %1329 = vmatprep.subr.mxu0 0.0
    %1330 = vmatpush2.msra.mxu0 0.0
    %1331 = vmatprep.subr.mxu0 0.0
    %1332 = vmatpush2.msra.mxu0 0.0
    %1333 = vmatprep.subr.mxu0 0.0
    %1334 = vmatpush2.msra.mxu0 0.0
    %1335 = vmatprep.subr.mxu0 0.0
    %1336 = vmatpush2.msra.mxu0 0.0
    %1337 = vmatprep.subr.mxu0 0.0
    %1338 = vmatpush2.msra.mxu0 0.0
    %1339 = vmatprep.subr.mxu0 0.0
    %1340 = vmatpush2.msra.mxu0 0.0
    %1341 = vmatprep.subr.mxu0 0.0
    %1342 = vmatpush2.msra.mxu0 0.0
    %1343 = vmatprep.subr.mxu0 0.0
    %1344 = vmatpush2.msra.mxu0 0.0
    %1345 = vmatprep.subr.mxu0 0.0
    %1346 = vmatpush2.msra.mxu0 0.0
    %1347 = vmatprep.subr.mxu0 0.0
    %1348 = vmatpush2.msra.mxu0 0.0
    %1349 = vmatprep.subr.mxu0 0.0
    %1350 = vmatpush2.msra.mxu0 0.0
    %1351 = vmatprep.subr.mxu0 0.0
    %1352 = vmatpush2.msra.mxu0 0.0
    %1353 = vmatprep.subr.mxu0 0.0
    %1354 = vmatpush2.msra.mxu0 0.0
    %1355 = vmatprep.subr.mxu0 0.0
    %1356 = vmatpush2.msra.mxu0 0.0
    %1357 = vmatprep.subr.mxu0 0.0
    %1358 = vmatpush2.msra.mxu0 0.0
    %1359 = vmatprep.subr.mxu0 0.0
    %1360 = vmatpush2.msra.mxu0 0.0
    %1361 = vmatprep.mubr.f32.mxu0 0.0
    %1362 = vmatmul.mubr.f32.gmra.mxu0 %v1292
    %v1363 = vpop.f32.mrf.mxu0
    %v1364 = vadd.f32 0.0, %v1363
    %v1365 = vpop.f32.mrf.mxu0
    %1366 = vmatprep.mubr.f32.mxu0 0.0
    %1367 = vmatmul.mubr.f32.gmra.mxu0 %v1295
    %v1368 = vpop.f32.mrf.mxu0
    %v1369 = vadd.f32 0.0, %v1368
    %v1370 = vpop.f32.mrf.mxu0
    %1371 = vdwg.mxu0
    %v1373 = vsel %vm1098, %v1277, 0
    %v1376 = vsel %vm1098, %v1278, 0
    %1378 = vmatprep.subr.mxu0 0.0
    %1379 = vmatpush1.msra.mxu0 0.0
    %1380 = vmatprep.subr.mxu0 0.0
    %1381 = vmatpush1.msra.mxu0 0.0
    %1382 = vmatprep.subr.mxu0 0.0
    %1383 = vmatpush1.msra.mxu0 0.0
    %1384 = vmatprep.subr.mxu0 0.0
    %1385 = vmatpush1.msra.mxu0 0.0
    %1386 = vmatprep.subr.mxu0 0.0
    %1387 = vmatpush1.msra.mxu0 0.0
    %1388 = vmatprep.subr.mxu0 0.0
    %1389 = vmatpush1.msra.mxu0 0.0
    %1390 = vmatprep.subr.mxu0 0.0
    %1391 = vmatpush1.msra.mxu0 0.0
    %1392 = vmatprep.subr.mxu0 0.0
    %1393 = vmatpush1.msra.mxu0 0.0
    %1394 = vmatprep.subr.mxu0 0.0
    %1395 = vmatpush1.msra.mxu0 0.0
    %1396 = vmatprep.subr.mxu0 0.0
    %1397 = vmatpush1.msra.mxu0 0.0
    %1398 = vmatprep.subr.mxu0 0.0
    %1399 = vmatpush1.msra.mxu0 0.0
    %1400 = vmatprep.subr.mxu0 0.0
    %1401 = vmatpush1.msra.mxu0 0.0
    %1402 = vmatprep.subr.mxu0 0.0
    %1403 = vmatpush1.msra.mxu0 0.0
    %1404 = vmatprep.subr.mxu0 0.0
    %1405 = vmatpush1.msra.mxu0 0.0
    %1406 = vmatprep.subr.mxu0 0.0
    %1407 = vmatpush1.msra.mxu0 %v366
    %1408 = vmatprep.subr.mxu0 0.0
    %1409 = vmatpush1.msra.mxu0 %v364
    %1410 = vmatprep.subr.mxu0 0.0
    %1411 = vmatpush2.msra.mxu0 0.0
    %1412 = vmatprep.subr.mxu0 0.0
    %1413 = vmatpush2.msra.mxu0 0.0
    %1414 = vmatprep.subr.mxu0 0.0
    %1415 = vmatpush2.msra.mxu0 0.0
    %1416 = vmatprep.subr.mxu0 0.0
    %1417 = vmatpush2.msra.mxu0 0.0
    %1418 = vmatprep.subr.mxu0 0.0
    %1419 = vmatpush2.msra.mxu0 0.0
    %1420 = vmatprep.subr.mxu0 0.0
    %1421 = vmatpush2.msra.mxu0 0.0
    %1422 = vmatprep.subr.mxu0 0.0
    %1423 = vmatpush2.msra.mxu0 0.0
    %1424 = vmatprep.subr.mxu0 0.0
    %1425 = vmatpush2.msra.mxu0 0.0
    %1426 = vmatprep.subr.mxu0 0.0
    %1427 = vmatpush2.msra.mxu0 0.0
    %1428 = vmatprep.subr.mxu0 0.0
    %1429 = vmatpush2.msra.mxu0 0.0
    %1430 = vmatprep.subr.mxu0 0.0
    %1431 = vmatpush2.msra.mxu0 0.0
    %1432 = vmatprep.subr.mxu0 0.0
    %1433 = vmatpush2.msra.mxu0 0.0
    %1434 = vmatprep.subr.mxu0 0.0
    %1435 = vmatpush2.msra.mxu0 0.0
    %1436 = vmatprep.subr.mxu0 0.0
    %1437 = vmatpush2.msra.mxu0 0.0
    %1438 = vmatprep.subr.mxu0 0.0
    %1439 = vmatpush2.msra.mxu0 0.0
    %1440 = vmatprep.subr.mxu0 0.0
    %1441 = vmatpush2.msra.mxu0 0.0
    %1442 = vmatprep.mubr.f32.mxu0 0.0
    %1443 = vmatmul.mubr.f32.gmra.mxu0 %v1373
    %v1444 = vpop.f32.mrf.mxu0
    %v1445 = vadd.f32 0.0, %v1444
    %v1446 = vpop.f32.mrf.mxu0
    %1447 = vmatprep.mubr.f32.mxu0 0.0
    %1448 = vmatmul.mubr.f32.gmra.mxu0 %v1376
    %v1449 = vpop.f32.mrf.mxu0
    %v1450 = vadd.f32 0.0, %v1449
    %v1451 = vpop.f32.mrf.mxu0
    %1452 = vdwg.mxu0
    %v1454 = vsel %vm1098, %v1279, 0
    %v1457 = vsel %vm1098, %v1280, 0
    %1459 = vmatprep.subr.mxu0 0.0
    %1460 = vmatpush1.msra.mxu0 0.0
    %1461 = vmatprep.subr.mxu0 0.0
    %1462 = vmatpush1.msra.mxu0 0.0
    %1463 = vmatprep.subr.mxu0 0.0
    %1464 = vmatpush1.msra.mxu0 0.0
    %1465 = vmatprep.subr.mxu0 0.0
    %1466 = vmatpush1.msra.mxu0 0.0
    %1467 = vmatprep.subr.mxu0 0.0
    %1468 = vmatpush1.msra.mxu0 0.0
    %1469 = vmatprep.subr.mxu0 0.0
    %1470 = vmatpush1.msra.mxu0 0.0
    %1471 = vmatprep.subr.mxu0 0.0
    %1472 = vmatpush1.msra.mxu0 0.0
    %1473 = vmatprep.subr.mxu0 0.0
    %1474 = vmatpush1.msra.mxu0 0.0
    %1475 = vmatprep.subr.mxu0 0.0
    %1476 = vmatpush1.msra.mxu0 0.0
    %1477 = vmatprep.subr.mxu0 0.0
    %1478 = vmatpush1.msra.mxu0 0.0
    %1479 = vmatprep.subr.mxu0 0.0
    %1480 = vmatpush1.msra.mxu0 0.0
    %1481 = vmatprep.subr.mxu0 0.0
    %1482 = vmatpush1.msra.mxu0 0.0
    %1483 = vmatprep.subr.mxu0 0.0
    %1484 = vmatpush1.msra.mxu0 0.0
    %1485 = vmatprep.subr.mxu0 0.0
    %1486 = vmatpush1.msra.mxu0 0.0
    %1487 = vmatprep.subr.mxu0 0.0
    %1488 = vmatpush1.msra.mxu0 %v372
    %1489 = vmatprep.subr.mxu0 0.0
    %1490 = vmatpush1.msra.mxu0 %v370
    %1491 = vmatprep.subr.mxu0 0.0
    %1492 = vmatpush2.msra.mxu0 0.0
    %1493 = vmatprep.subr.mxu0 0.0
    %1494 = vmatpush2.msra.mxu0 0.0
    %1495 = vmatprep.subr.mxu0 0.0
    %1496 = vmatpush2.msra.mxu0 0.0
    %1497 = vmatprep.subr.mxu0 0.0
    %1498 = vmatpush2.msra.mxu0 0.0
    %1499 = vmatprep.subr.mxu0 0.0
    %1500 = vmatpush2.msra.mxu0 0.0
    %1501 = vmatprep.subr.mxu0 0.0
    %1502 = vmatpush2.msra.mxu0 0.0
    %1503 = vmatprep.subr.mxu0 0.0
    %1504 = vmatpush2.msra.mxu0 0.0
    %1505 = vmatprep.subr.mxu0 0.0
    %1506 = vmatpush2.msra.mxu0 0.0
    %1507 = vmatprep.subr.mxu0 0.0
    %1508 = vmatpush2.msra.mxu0 0.0
    %1509 = vmatprep.subr.mxu0 0.0
    %1510 = vmatpush2.msra.mxu0 0.0
    %1511 = vmatprep.subr.mxu0 0.0
    %1512 = vmatpush2.msra.mxu0 0.0
    %1513 = vmatprep.subr.mxu0 0.0
    %1514 = vmatpush2.msra.mxu0 0.0
    %1515 = vmatprep.subr.mxu0 0.0
    %1516 = vmatpush2.msra.mxu0 0.0
    %1517 = vmatprep.subr.mxu0 0.0
    %1518 = vmatpush2.msra.mxu0 0.0
    %1519 = vmatprep.subr.mxu0 0.0
    %1520 = vmatpush2.msra.mxu0 0.0
    %1521 = vmatprep.subr.mxu0 0.0
    %1522 = vmatpush2.msra.mxu0 0.0
    %1523 = vmatprep.mubr.f32.mxu0 0.0
    %1524 = vmatmul.mubr.f32.gmra.mxu0 %v1454
    %v1525 = vpop.f32.mrf.mxu0
    %v1526 = vadd.f32 0.0, %v1525
    %v1527 = vpop.f32.mrf.mxu0
    %1528 = vmatprep.mubr.f32.mxu0 0.0
    %1529 = vmatmul.mubr.f32.gmra.mxu0 %v1457
    %v1530 = vpop.f32.mrf.mxu0
    %v1531 = vadd.f32 0.0, %v1530
    %v1532 = vpop.f32.mrf.mxu0
    %1533 = vdwg.mxu0
    %v1535 = vsel %vm1098, %v1281, 0
    %v1538 = vsel %vm1098, %v1282, 0
    %1540 = vmatprep.subr.mxu0 0.0
    %1541 = vmatpush1.msra.mxu0 0.0
    %1542 = vmatprep.subr.mxu0 0.0
    %1543 = vmatpush1.msra.mxu0 0.0
    %1544 = vmatprep.subr.mxu0 0.0
    %1545 = vmatpush1.msra.mxu0 0.0
    %1546 = vmatprep.subr.mxu0 0.0
    %1547 = vmatpush1.msra.mxu0 0.0
    %1548 = vmatprep.subr.mxu0 0.0
    %1549 = vmatpush1.msra.mxu0 0.0
    %1550 = vmatprep.subr.mxu0 0.0
    %1551 = vmatpush1.msra.mxu0 0.0
    %1552 = vmatprep.subr.mxu0 0.0
    %1553 = vmatpush1.msra.mxu0 0.0
    %1554 = vmatprep.subr.mxu0 0.0
    %1555 = vmatpush1.msra.mxu0 0.0
    %1556 = vmatprep.subr.mxu0 0.0
    %1557 = vmatpush1.msra.mxu0 0.0
    %1558 = vmatprep.subr.mxu0 0.0
    %1559 = vmatpush1.msra.mxu0 0.0
    %1560 = vmatprep.subr.mxu0 0.0
    %1561 = vmatpush1.msra.mxu0 0.0
    %1562 = vmatprep.subr.mxu0 0.0
    %1563 = vmatpush1.msra.mxu0 0.0
    %1564 = vmatprep.subr.mxu0 0.0
    %1565 = vmatpush1.msra.mxu0 0.0
    %1566 = vmatprep.subr.mxu0 0.0
    %1567 = vmatpush1.msra.mxu0 0.0
    %1568 = vmatprep.subr.mxu0 0.0
    %1569 = vmatpush1.msra.mxu0 %v378
    %1570 = vmatprep.subr.mxu0 0.0
    %1571 = vmatpush1.msra.mxu0 %v376
    %1572 = vmatprep.subr.mxu0 0.0
    %1573 = vmatpush2.msra.mxu0 0.0
    %1574 = vmatprep.subr.mxu0 0.0
    %1575 = vmatpush2.msra.mxu0 0.0
    %1576 = vmatprep.subr.mxu0 0.0
    %1577 = vmatpush2.msra.mxu0 0.0
    %1578 = vmatprep.subr.mxu0 0.0
    %1579 = vmatpush2.msra.mxu0 0.0
    %1580 = vmatprep.subr.mxu0 0.0
    %1581 = vmatpush2.msra.mxu0 0.0
    %1582 = vmatprep.subr.mxu0 0.0
    %1583 = vmatpush2.msra.mxu0 0.0
    %1584 = vmatprep.subr.mxu0 0.0
    %1585 = vmatpush2.msra.mxu0 0.0
    %1586 = vmatprep.subr.mxu0 0.0
    %1587 = vmatpush2.msra.mxu0 0.0
    %1588 = vmatprep.subr.mxu0 0.0
    %1589 = vmatpush2.msra.mxu0 0.0
    %1590 = vmatprep.subr.mxu0 0.0
    %1591 = vmatpush2.msra.mxu0 0.0
    %1592 = vmatprep.subr.mxu0 0.0
    %1593 = vmatpush2.msra.mxu0 0.0
    %1594 = vmatprep.subr.mxu0 0.0
    %1595 = vmatpush2.msra.mxu0 0.0
    %1596 = vmatprep.subr.mxu0 0.0
    %1597 = vmatpush2.msra.mxu0 0.0
    %1598 = vmatprep.subr.mxu0 0.0
    %1599 = vmatpush2.msra.mxu0 0.0
    %1600 = vmatprep.subr.mxu0 0.0
    %1601 = vmatpush2.msra.mxu0 0.0
    %1602 = vmatprep.subr.mxu0 0.0
    %1603 = vmatpush2.msra.mxu0 0.0
    %1604 = vmatprep.mubr.f32.mxu0 0.0
    %1605 = vmatmul.mubr.f32.gmra.mxu0 %v1535
    %v1606 = vpop.f32.mrf.mxu0
    %v1607 = vadd.f32 0.0, %v1606
    %v1608 = vpop.f32.mrf.mxu0
    %1609 = vmatprep.mubr.f32.mxu0 0.0
    %1610 = vmatmul.mubr.f32.gmra.mxu0 %v1538
    %v1611 = vpop.f32.mrf.mxu0
    %v1612 = vadd.f32 0.0, %v1611
    %v1613 = vpop.f32.mrf.mxu0
    %1614 = vdwg.mxu0
    %v1616 = vsel %vm1098, %v1283, 0
    %v1619 = vsel %vm1098, %v1284, 0
    %1621 = vmatprep.subr.mxu0 0.0
    %1622 = vmatpush1.msra.mxu0 0.0
    %1623 = vmatprep.subr.mxu0 0.0
    %1624 = vmatpush1.msra.mxu0 0.0
    %1625 = vmatprep.subr.mxu0 0.0
    %1626 = vmatpush1.msra.mxu0 0.0
    %1627 = vmatprep.subr.mxu0 0.0
    %1628 = vmatpush1.msra.mxu0 0.0
    %1629 = vmatprep.subr.mxu0 0.0
    %1630 = vmatpush1.msra.mxu0 0.0
    %1631 = vmatprep.subr.mxu0 0.0
    %1632 = vmatpush1.msra.mxu0 0.0
    %1633 = vmatprep.subr.mxu0 0.0
    %1634 = vmatpush1.msra.mxu0 0.0
    %1635 = vmatprep.subr.mxu0 0.0
    %1636 = vmatpush1.msra.mxu0 0.0
    %1637 = vmatprep.subr.mxu0 0.0
    %1638 = vmatpush1.msra.mxu0 0.0
    %1639 = vmatprep.subr.mxu0 0.0
    %1640 = vmatpush1.msra.mxu0 0.0
    %1641 = vmatprep.subr.mxu0 0.0
    %1642 = vmatpush1.msra.mxu0 0.0
    %1643 = vmatprep.subr.mxu0 0.0
    %1644 = vmatpush1.msra.mxu0 0.0
    %1645 = vmatprep.subr.mxu0 0.0
    %1646 = vmatpush1.msra.mxu0 0.0
    %1647 = vmatprep.subr.mxu0 0.0
    %1648 = vmatpush1.msra.mxu0 0.0
    %1649 = vmatprep.subr.mxu0 0.0
    %1650 = vmatpush1.msra.mxu0 %v330
    %1651 = vmatprep.subr.mxu0 0.0
    %1652 = vmatpush1.msra.mxu0 %v325
    %1653 = vmatprep.subr.mxu0 0.0
    %1654 = vmatpush2.msra.mxu0 0.0
    %1655 = vmatprep.subr.mxu0 0.0
    %1656 = vmatpush2.msra.mxu0 0.0
    %1657 = vmatprep.subr.mxu0 0.0
    %1658 = vmatpush2.msra.mxu0 0.0
    %1659 = vmatprep.subr.mxu0 0.0
    %1660 = vmatpush2.msra.mxu0 0.0
    %1661 = vmatprep.subr.mxu0 0.0
    %1662 = vmatpush2.msra.mxu0 0.0
    %1663 = vmatprep.subr.mxu0 0.0
    %1664 = vmatpush2.msra.mxu0 0.0
    %1665 = vmatprep.subr.mxu0 0.0
    %1666 = vmatpush2.msra.mxu0 0.0
    %1667 = vmatprep.subr.mxu0 0.0
    %1668 = vmatpush2.msra.mxu0 0.0
    %1669 = vmatprep.subr.mxu0 0.0
    %1670 = vmatpush2.msra.mxu0 0.0
    %1671 = vmatprep.subr.mxu0 0.0
    %1672 = vmatpush2.msra.mxu0 0.0
    %1673 = vmatprep.subr.mxu0 0.0
    %1674 = vmatpush2.msra.mxu0 0.0
    %1675 = vmatprep.subr.mxu0 0.0
    %1676 = vmatpush2.msra.mxu0 0.0
    %1677 = vmatprep.subr.mxu0 0.0
    %1678 = vmatpush2.msra.mxu0 0.0
    %1679 = vmatprep.subr.mxu0 0.0
    %1680 = vmatpush2.msra.mxu0 0.0
    %1681 = vmatprep.subr.mxu0 0.0
    %1682 = vmatpush2.msra.mxu0 0.0
    %1683 = vmatprep.subr.mxu0 0.0
    %1684 = vmatpush2.msra.mxu0 0.0
    %1685 = vmatprep.mubr.f32.mxu0 0.0
    %1686 = vmatmul.mubr.f32.gmra.mxu0 %v1616
    %v1687 = vpop.f32.mrf.mxu0
    %v1688 = vadd.f32 0.0, %v1687
    %v1689 = vpop.f32.mrf.mxu0
    %1690 = vmatprep.mubr.f32.mxu0 0.0
    %1691 = vmatmul.mubr.f32.gmra.mxu0 %v1619
    %v1692 = vpop.f32.mrf.mxu0
    %v1693 = vadd.f32 0.0, %v1692
    %v1694 = vpop.f32.mrf.mxu0
    %1695 = vdwg.mxu0
    %v1697 = vsel %vm1098, %v1285, 0
    %v1700 = vsel %vm1098, %v1286, 0
    %1702 = vmatprep.subr.mxu0 0.0
    %1703 = vmatpush1.msra.mxu0 0.0
    %1704 = vmatprep.subr.mxu0 0.0
    %1705 = vmatpush1.msra.mxu0 0.0
    %1706 = vmatprep.subr.mxu0 0.0
    %1707 = vmatpush1.msra.mxu0 0.0
    %1708 = vmatprep.subr.mxu0 0.0
    %1709 = vmatpush1.msra.mxu0 0.0
    %1710 = vmatprep.subr.mxu0 0.0
    %1711 = vmatpush1.msra.mxu0 0.0
    %1712 = vmatprep.subr.mxu0 0.0
    %1713 = vmatpush1.msra.mxu0 0.0
    %1714 = vmatprep.subr.mxu0 0.0
    %1715 = vmatpush1.msra.mxu0 0.0
    %1716 = vmatprep.subr.mxu0 0.0
    %1717 = vmatpush1.msra.mxu0 0.0
    %1718 = vmatprep.subr.mxu0 0.0
    %1719 = vmatpush1.msra.mxu0 0.0
    %1720 = vmatprep.subr.mxu0 0.0
    %1721 = vmatpush1.msra.mxu0 0.0
    %1722 = vmatprep.subr.mxu0 0.0
    %1723 = vmatpush1.msra.mxu0 0.0
    %1724 = vmatprep.subr.mxu0 0.0
    %1725 = vmatpush1.msra.mxu0 0.0
    %1726 = vmatprep.subr.mxu0 0.0
    %1727 = vmatpush1.msra.mxu0 0.0
    %1728 = vmatprep.subr.mxu0 0.0
    %1729 = vmatpush1.msra.mxu0 0.0
    %1730 = vmatprep.subr.mxu0 0.0
    %1731 = vmatpush1.msra.mxu0 %v386
    %1732 = vmatprep.subr.mxu0 0.0
    %1733 = vmatpush1.msra.mxu0 %v384
    %1734 = vmatprep.subr.mxu0 0.0
    %1735 = vmatpush2.msra.mxu0 0.0
    %1736 = vmatprep.subr.mxu0 0.0
    %1737 = vmatpush2.msra.mxu0 0.0
    %1738 = vmatprep.subr.mxu0 0.0
    %1739 = vmatpush2.msra.mxu0 0.0
    %1740 = vmatprep.subr.mxu0 0.0
    %1741 = vmatpush2.msra.mxu0 0.0
    %1742 = vmatprep.subr.mxu0 0.0
    %1743 = vmatpush2.msra.mxu0 0.0
    %1744 = vmatprep.subr.mxu0 0.0
    %1745 = vmatpush2.msra.mxu0 0.0
    %1746 = vmatprep.subr.mxu0 0.0
    %1747 = vmatpush2.msra.mxu0 0.0
    %1748 = vmatprep.subr.mxu0 0.0
    %1749 = vmatpush2.msra.mxu0 0.0
    %1750 = vmatprep.subr.mxu0 0.0
    %1751 = vmatpush2.msra.mxu0 0.0
    %1752 = vmatprep.subr.mxu0 0.0
    %1753 = vmatpush2.msra.mxu0 0.0
    %1754 = vmatprep.subr.mxu0 0.0
    %1755 = vmatpush2.msra.mxu0 0.0
    %1756 = vmatprep.subr.mxu0 0.0
    %1757 = vmatpush2.msra.mxu0 0.0
    %1758 = vmatprep.subr.mxu0 0.0
    %1759 = vmatpush2.msra.mxu0 0.0
    %1760 = vmatprep.subr.mxu0 0.0
    %1761 = vmatpush2.msra.mxu0 0.0
    %1762 = vmatprep.subr.mxu0 0.0
    %1763 = vmatpush2.msra.mxu0 0.0
    %1764 = vmatprep.subr.mxu0 0.0
    %1765 = vmatpush2.msra.mxu0 0.0
    %1766 = vmatprep.mubr.f32.mxu0 0.0
    %1767 = vmatmul.mubr.f32.gmra.mxu0 %v1697
    %v1768 = vpop.f32.mrf.mxu0
    %v1769 = vadd.f32 0.0, %v1768
    %v1770 = vpop.f32.mrf.mxu0
    %1771 = vmatprep.mubr.f32.mxu0 0.0
    %1772 = vmatmul.mubr.f32.gmra.mxu0 %v1700
    %v1773 = vpop.f32.mrf.mxu0
    %v1774 = vadd.f32 0.0, %v1773
    %v1775 = vpop.f32.mrf.mxu0
    %1776 = vdwg.mxu0
    %v1778 = vsel %vm1098, %v1287, 0
    %v1781 = vsel %vm1098, %v1288, 0
    %1783 = vmatprep.subr.mxu0 0.0
    %1784 = vmatpush1.msra.mxu0 0.0
    %1785 = vmatprep.subr.mxu0 0.0
    %1786 = vmatpush1.msra.mxu0 0.0
    %1787 = vmatprep.subr.mxu0 0.0
    %1788 = vmatpush1.msra.mxu0 0.0
    %1789 = vmatprep.subr.mxu0 0.0
    %1790 = vmatpush1.msra.mxu0 0.0
    %1791 = vmatprep.subr.mxu0 0.0
    %1792 = vmatpush1.msra.mxu0 0.0
    %1793 = vmatprep.subr.mxu0 0.0
    %1794 = vmatpush1.msra.mxu0 0.0
    %1795 = vmatprep.subr.mxu0 0.0
    %1796 = vmatpush1.msra.mxu0 0.0
    %1797 = vmatprep.subr.mxu0 0.0
    %1798 = vmatpush1.msra.mxu0 0.0
    %1799 = vmatprep.subr.mxu0 0.0
    %1800 = vmatpush1.msra.mxu0 0.0
    %1801 = vmatprep.subr.mxu0 0.0
    %1802 = vmatpush1.msra.mxu0 0.0
    %1803 = vmatprep.subr.mxu0 0.0
    %1804 = vmatpush1.msra.mxu0 0.0
    %1805 = vmatprep.subr.mxu0 0.0
    %1806 = vmatpush1.msra.mxu0 0.0
    %1807 = vmatprep.subr.mxu0 0.0
    %1808 = vmatpush1.msra.mxu0 0.0
    %1809 = vmatprep.subr.mxu0 0.0
    %1810 = vmatpush1.msra.mxu0 0.0
    %1811 = vmatprep.subr.mxu0 0.0
    %1812 = vmatpush1.msra.mxu0 %v392
    %1813 = vmatprep.subr.mxu0 0.0
    %1814 = vmatpush1.msra.mxu0 %v390
    %1815 = vmatprep.subr.mxu0 0.0
    %1816 = vmatpush2.msra.mxu0 0.0
    %1817 = vmatprep.subr.mxu0 0.0
    %1818 = vmatpush2.msra.mxu0 0.0
    %1819 = vmatprep.subr.mxu0 0.0
    %1820 = vmatpush2.msra.mxu0 0.0
    %1821 = vmatprep.subr.mxu0 0.0
    %1822 = vmatpush2.msra.mxu0 0.0
    %1823 = vmatprep.subr.mxu0 0.0
    %1824 = vmatpush2.msra.mxu0 0.0
    %1825 = vmatprep.subr.mxu0 0.0
    %1826 = vmatpush2.msra.mxu0 0.0
    %1827 = vmatprep.subr.mxu0 0.0
    %1828 = vmatpush2.msra.mxu0 0.0
    %1829 = vmatprep.subr.mxu0 0.0
    %1830 = vmatpush2.msra.mxu0 0.0
    %1831 = vmatprep.subr.mxu0 0.0
    %1832 = vmatpush2.msra.mxu0 0.0
    %1833 = vmatprep.subr.mxu0 0.0
    %1834 = vmatpush2.msra.mxu0 0.0
    %1835 = vmatprep.subr.mxu0 0.0
    %1836 = vmatpush2.msra.mxu0 0.0
    %1837 = vmatprep.subr.mxu0 0.0
    %1838 = vmatpush2.msra.mxu0 0.0
    %1839 = vmatprep.subr.mxu0 0.0
    %1840 = vmatpush2.msra.mxu0 0.0
    %1841 = vmatprep.subr.mxu0 0.0
    %1842 = vmatpush2.msra.mxu0 0.0
    %1843 = vmatprep.subr.mxu0 0.0
    %1844 = vmatpush2.msra.mxu0 0.0
    %1845 = vmatprep.subr.mxu0 0.0
    %1846 = vmatpush2.msra.mxu0 0.0
    %1847 = vmatprep.mubr.f32.mxu0 0.0
    %1848 = vmatmul.mubr.f32.gmra.mxu0 %v1778
    %v1849 = vpop.f32.mrf.mxu0
    %v1850 = vadd.f32 0.0, %v1849
    %v1851 = vpop.f32.mrf.mxu0
    %1852 = vmatprep.mubr.f32.mxu0 0.0
    %1853 = vmatmul.mubr.f32.gmra.mxu0 %v1781
    %v1854 = vpop.f32.mrf.mxu0
    %v1855 = vadd.f32 0.0, %v1854
    %v1856 = vpop.f32.mrf.mxu0
    %1857 = vdwg.mxu0
    %v1859 = vsel %vm1098, %v1289, 0
    %v1862 = vsel %vm1098, %v1290, 0
    %1864 = vmatprep.subr.mxu0 0.0
    %1865 = vmatpush1.msra.mxu0 0.0
    %1866 = vmatprep.subr.mxu0 0.0
    %1867 = vmatpush1.msra.mxu0 0.0
    %1868 = vmatprep.subr.mxu0 0.0
    %1869 = vmatpush1.msra.mxu0 0.0
    %1870 = vmatprep.subr.mxu0 0.0
    %1871 = vmatpush1.msra.mxu0 0.0
    %1872 = vmatprep.subr.mxu0 0.0
    %1873 = vmatpush1.msra.mxu0 0.0
    %1874 = vmatprep.subr.mxu0 0.0
    %1875 = vmatpush1.msra.mxu0 0.0
    %1876 = vmatprep.subr.mxu0 0.0
    %1877 = vmatpush1.msra.mxu0 0.0
    %1878 = vmatprep.subr.mxu0 0.0
    %1879 = vmatpush1.msra.mxu0 0.0
    %1880 = vmatprep.subr.mxu0 0.0
    %1881 = vmatpush1.msra.mxu0 0.0
    %1882 = vmatprep.subr.mxu0 0.0
    %1883 = vmatpush1.msra.mxu0 0.0
    %1884 = vmatprep.subr.mxu0 0.0
    %1885 = vmatpush1.msra.mxu0 0.0
    %1886 = vmatprep.subr.mxu0 0.0
    %1887 = vmatpush1.msra.mxu0 0.0
    %1888 = vmatprep.subr.mxu0 0.0
    %1889 = vmatpush1.msra.mxu0 0.0
    %1890 = vmatprep.subr.mxu0 0.0
    %1891 = vmatpush1.msra.mxu0 0.0
    %1892 = vmatprep.subr.mxu0 0.0
    %1893 = vmatpush1.msra.mxu0 %v398
    %1894 = vmatprep.subr.mxu0 0.0
    %1895 = vmatpush1.msra.mxu0 %v396
    %1896 = vmatprep.subr.mxu0 0.0
    %1897 = vmatpush2.msra.mxu0 0.0
    %1898 = vmatprep.subr.mxu0 0.0
    %1899 = vmatpush2.msra.mxu0 0.0
    %1900 = vmatprep.subr.mxu0 0.0
    %1901 = vmatpush2.msra.mxu0 0.0
    %1902 = vmatprep.subr.mxu0 0.0
    %1903 = vmatpush2.msra.mxu0 0.0
    %1904 = vmatprep.subr.mxu0 0.0
    %1905 = vmatpush2.msra.mxu0 0.0
    %1906 = vmatprep.subr.mxu0 0.0
    %1907 = vmatpush2.msra.mxu0 0.0
    %1908 = vmatprep.subr.mxu0 0.0
    %1909 = vmatpush2.msra.mxu0 0.0
    %1910 = vmatprep.subr.mxu0 0.0
    %1911 = vmatpush2.msra.mxu0 0.0
    %1912 = vmatprep.subr.mxu0 0.0
    %1913 = vmatpush2.msra.mxu0 0.0
    %1914 = vmatprep.subr.mxu0 0.0
    %1915 = vmatpush2.msra.mxu0 0.0
    %1916 = vmatprep.subr.mxu0 0.0
    %1917 = vmatpush2.msra.mxu0 0.0
    %1918 = vmatprep.subr.mxu0 0.0
    %1919 = vmatpush2.msra.mxu0 0.0
    %1920 = vmatprep.subr.mxu0 0.0
    %1921 = vmatpush2.msra.mxu0 0.0
    %1922 = vmatprep.subr.mxu0 0.0
    %1923 = vmatpush2.msra.mxu0 0.0
    %1924 = vmatprep.subr.mxu0 0.0
    %1925 = vmatpush2.msra.mxu0 0.0
    %1926 = vmatprep.subr.mxu0 0.0
    %1927 = vmatpush2.msra.mxu0 0.0
    %1928 = vmatprep.mubr.f32.mxu0 0.0
    %1929 = vmatmul.mubr.f32.gmra.mxu0 %v1859
    %v1930 = vpop.f32.mrf.mxu0
    %v1931 = vadd.f32 0.0, %v1930
    %v1932 = vpop.f32.mrf.mxu0
    %1933 = vmatprep.mubr.f32.mxu0 0.0
    %1934 = vmatmul.mubr.f32.gmra.mxu0 %v1862
    %v1935 = vpop.f32.mrf.mxu0
    %v1936 = vadd.f32 0.0, %v1935
    %v1937 = vpop.f32.mrf.mxu0
    %1938 = vdwg.mxu0
    %1941 = vrot.lane.b32.xlu0 %v1445, 8
    %v1942 = vpop.permute.xlu0 %1941
    %1943 = vrot.lane.b32.xlu0 %v1450, 8
    %v1944 = vpop.permute.xlu0 %1943
    %1949 = vrot.lane.b32.xlu0 %v1526, 16
    %v1950 = vpop.permute.xlu0 %1949
    %1951 = vrot.lane.b32.xlu0 %v1531, 16
    %v1952 = vpop.permute.xlu0 %1951
    %1957 = vrot.lane.b32.xlu0 %v1607, 24
    %v1958 = vpop.permute.xlu0 %1957
    %1959 = vrot.lane.b32.xlu0 %v1612, 24
    %v1960 = vpop.permute.xlu0 %1959
    %v1963 = vsel %vm405, %v1364, %v1942
    %v1964 = vsel %vm405, %v1369, %v1944
    %v1965 = vsel %vm1098, %v1963, %v1950
    %v1966 = vsel %vm1098, %v1964, %v1952
    %vm1967 = vcmask 195584
    %v1968 = vsel %vm1967, %v1965, %v1958
    %v1969 = vsel %vm1967, %v1966, %v1960
    %1972 = vrot.lane.b32.xlu0 %v1769, 8
    %v1973 = vpop.permute.xlu0 %1972
    %1974 = vrot.lane.b32.xlu0 %v1774, 8
    %v1975 = vpop.permute.xlu0 %1974
    %1980 = vrot.lane.b32.xlu0 %v1850, 16
    %v1981 = vpop.permute.xlu0 %1980
    %1982 = vrot.lane.b32.xlu0 %v1855, 16
    %v1983 = vpop.permute.xlu0 %1982
    %1988 = vrot.lane.b32.xlu0 %v1931, 24
    %v1989 = vpop.permute.xlu0 %1988
    %1990 = vrot.lane.b32.xlu0 %v1936, 24
    %v1991 = vpop.permute.xlu0 %1990
    %v1994 = vsel %vm405, %v1688, %v1973
    %v1995 = vsel %vm405, %v1693, %v1975
    %v1996 = vsel %vm1098, %v1994, %v1981
    %v1997 = vsel %vm1098, %v1995, %v1983
    %v1998 = vsel %vm1967, %v1996, %v1989
    %v1999 = vsel %vm1967, %v1997, %v1991
    %v2000 = vld [vmem:[#allocation10] sm:$0xff]
    %v2001 = vld [vmem:[#allocation10 + $0x8] sm:$0xff]
    %v2002 = vld [vmem:[#allocation10 + $0x10] sm:$0xff]
    %v2003 = vld [vmem:[#allocation10 + $0x18] sm:$0xff]
    %v2004 = vld [vmem:[%s7] sm:$0x1]
    %v2006 = vlaneseq
    %v2007 = vshrl.u32 %v2006, 7
    %v2008 = vsub.s32 0, %v2007
    %v2009 = vrot.slane %v2004, %v2008
    %v2012 = vsel %vm127, %v1968, 0
    %v2015 = vsel %vm127, %v1969, 0
    %v2018 = vsel %vm127, %v1998, 0
    %v2021 = vsel %vm127, %v1999, 0
    %2023 = vmatprep.subr.mxu0 0.0
    %2024 = vmatpush1.msra.mxu0 0.0
    %2025 = vmatprep.subr.mxu0 0.0
    %2026 = vmatpush1.msra.mxu0 0.0
    %2027 = vmatprep.subr.mxu0 0.0
    %2028 = vmatpush1.msra.mxu0 0.0
    %2029 = vmatprep.subr.mxu0 0.0
    %2030 = vmatpush1.msra.mxu0 0.0
    %2031 = vmatprep.subr.mxu0 0.0
    %2032 = vmatpush1.msra.mxu0 0.0
    %2033 = vmatprep.subr.mxu0 0.0
    %2034 = vmatpush1.msra.mxu0 0.0
    %2035 = vmatprep.subr.mxu0 0.0
    %2036 = vmatpush1.msra.mxu0 0.0
    %2037 = vmatprep.subr.mxu0 0.0
    %2038 = vmatpush1.msra.mxu0 0.0
    %2039 = vmatprep.subr.mxu0 0.0
    %2040 = vmatpush1.msra.mxu0 0.0
    %2041 = vmatprep.subr.mxu0 0.0
    %2042 = vmatpush1.msra.mxu0 0.0
    %2043 = vmatprep.subr.mxu0 0.0
    %2044 = vmatpush1.msra.mxu0 0.0
    %2045 = vmatprep.subr.mxu0 0.0
    %2046 = vmatpush1.msra.mxu0 0.0
    %2047 = vmatprep.subr.mxu0 0.0
    %2048 = vmatpush1.msra.mxu0 %v2003
    %2049 = vmatprep.subr.mxu0 0.0
    %2050 = vmatpush1.msra.mxu0 %v2002
    %2051 = vmatprep.subr.mxu0 0.0
    %2052 = vmatpush1.msra.mxu0 %v2001
    %2053 = vmatprep.subr.mxu0 0.0
    %2054 = vmatpush1.msra.mxu0 %v2000
    %2055 = vmatprep.subr.mxu0 0.0
    %2056 = vmatpush2.msra.mxu0 0.0
    %2057 = vmatprep.subr.mxu0 0.0
    %2058 = vmatpush2.msra.mxu0 0.0
    %2059 = vmatprep.subr.mxu0 0.0
    %2060 = vmatpush2.msra.mxu0 0.0
    %2061 = vmatprep.subr.mxu0 0.0
    %2062 = vmatpush2.msra.mxu0 0.0
    %2063 = vmatprep.subr.mxu0 0.0
    %2064 = vmatpush2.msra.mxu0 0.0
    %2065 = vmatprep.subr.mxu0 0.0
    %2066 = vmatpush2.msra.mxu0 0.0
    %2067 = vmatprep.subr.mxu0 0.0
    %2068 = vmatpush2.msra.mxu0 0.0
    %2069 = vmatprep.subr.mxu0 0.0
    %2070 = vmatpush2.msra.mxu0 0.0
    %2071 = vmatprep.subr.mxu0 0.0
    %2072 = vmatpush2.msra.mxu0 0.0
    %2073 = vmatprep.subr.mxu0 0.0
    %2074 = vmatpush2.msra.mxu0 0.0
    %2075 = vmatprep.subr.mxu0 0.0
    %2076 = vmatpush2.msra.mxu0 0.0
    %2077 = vmatprep.subr.mxu0 0.0
    %2078 = vmatpush2.msra.mxu0 0.0
    %2079 = vmatprep.subr.mxu0 0.0
    %2080 = vmatpush2.msra.mxu0 0.0
    %2081 = vmatprep.subr.mxu0 0.0
    %2082 = vmatpush2.msra.mxu0 0.0
    %2083 = vmatprep.subr.mxu0 0.0
    %2084 = vmatpush2.msra.mxu0 0.0
    %2085 = vmatprep.subr.mxu0 0.0
    %2086 = vmatpush2.msra.mxu0 0.0
    %2087 = vmatprep.mubr.f32.mxu0 0.0
    %2088 = vmatmul.mubr.f32.gmra.mxu0 %v2012
    %v2089 = vpop.f32.mrf.mxu0
    %v2090 = vadd.f32 %v2009, %v2089
    %v2091 = vpop.f32.mrf.mxu0
    %2092 = vmatprep.mubr.f32.mxu0 0.0
    %2093 = vmatmul.mubr.f32.gmra.mxu0 %v2015
    %v2094 = vpop.f32.mrf.mxu0
    %v2095 = vadd.f32 %v2009, %v2094
    %v2096 = vpop.f32.mrf.mxu0
    %2097 = vmatprep.mubr.f32.mxu0 0.0
    %2098 = vmatmul.mubr.f32.gmra.mxu0 %v2018
    %v2099 = vpop.f32.mrf.mxu0
    %v2100 = vadd.f32 %v2009, %v2099
    %v2101 = vpop.f32.mrf.mxu0
    %2102 = vmatprep.mubr.f32.mxu0 0.0
    %2103 = vmatmul.mubr.f32.gmra.mxu0 %v2021
    %v2104 = vpop.f32.mrf.mxu0
    %v2105 = vadd.f32 %v2009, %v2104
    %v2106 = vpop.f32.mrf.mxu0
    %2107 = vdwg.mxu0
    %v2108 = vadd.f32 %v104, %v2090
    %v2109 = vadd.f32 %v105, %v2095
    %v2110 = vadd.f32 %v106, %v2100
    %v2111 = vadd.f32 %v107, %v2105
    %v2112 = vsel %vm127, %v2108, 0.0
    %2113 = vadd.xlane.f32.xlu0 %v2112
    %v2114 = vpop.xlane.xlu0 %2113
    %v2115 = vsel %vm127, %v2109, 0.0
    %2116 = vadd.xlane.f32.xlu0 %v2115
    %v2117 = vpop.xlane.xlu0 %2116
    %v2118 = vsel %vm127, %v2110, 0.0
    %2119 = vadd.xlane.f32.xlu0 %v2118
    %v2120 = vpop.xlane.xlu0 %2119
    %v2121 = vsel %vm127, %v2111, 0.0
    %2122 = vadd.xlane.f32.xlu0 %v2121
    %v2123 = vpop.xlane.xlu0 %2122
    %v2124 = vrcp.pop 32.0
    %v2125 = vmul.f32 %v2114, %v2124
    %v2126 = vmul.f32 %v2117, %v2124
    %v2127 = vmul.f32 %v2120, %v2124
    %v2128 = vmul.f32 %v2123, %v2124
    %v2129 = vsub.f32 %v2108, %v2125
    %v2130 = vsub.f32 %v2109, %v2126
    %v2131 = vsub.f32 %v2110, %v2127
    %v2132 = vsub.f32 %v2111, %v2128
    %v2133 = vmul.f32 %v2129, %v2129
    %v2134 = vmul.f32 %v2130, %v2130
    %v2135 = vmul.f32 %v2131, %v2131
    %v2136 = vmul.f32 %v2132, %v2132
    %v2137 = vsel %vm127, %v2133, 0.0
    %2138 = vadd.xlane.f32.xlu0 %v2137
    %v2139 = vpop.xlane.xlu0 %2138
    %v2140 = vsel %vm127, %v2134, 0.0
    %2141 = vadd.xlane.f32.xlu0 %v2140
    %v2142 = vpop.xlane.xlu0 %2141
    %v2143 = vsel %vm127, %v2135, 0.0
    %2144 = vadd.xlane.f32.xlu0 %v2143
    %v2145 = vpop.xlane.xlu0 %2144
    %v2146 = vsel %vm127, %v2136, 0.0
    %2147 = vadd.xlane.f32.xlu0 %v2146
    %v2148 = vpop.xlane.xlu0 %2147
    %v2149 = vmul.f32 %v2139, %v2124
    %v2150 = vmul.f32 %v2142, %v2124
    %v2151 = vmul.f32 %v2145, %v2124
    %v2152 = vmul.f32 %v2148, %v2124
    %v2153 = vadd.f32 %v2149, 1e-05
    %v2154 = vadd.f32 %v2150, 1e-05
    %v2155 = vadd.f32 %v2151, 1e-05
    %v2156 = vadd.f32 %v2152, 1e-05
    %v2157 = vrsqrt.pop %v2153
    %v2158 = vrsqrt.pop %v2154
    %v2159 = vrsqrt.pop %v2155
    %v2160 = vrsqrt.pop %v2156
    %v2161 = vmul.f32 %v2129, %v2157
    %v2162 = vmul.f32 %v2130, %v2158
    %v2163 = vmul.f32 %v2131, %v2159
    %v2164 = vmul.f32 %v2132, %v2160
    %v2165 = vld [vmem:[%s8] sm:$0x1]
    %v2167 = vlaneseq
    %v2168 = vshrl.u32 %v2167, 7
    %v2169 = vsub.s32 0, %v2168
    %v2170 = vrot.slane %v2165, %v2169
    %v2172 = vmul.f32 %v2161, %v2170
    %v2173 = vmul.f32 %v2162, %v2170
    %v2174 = vmul.f32 %v2163, %v2170
    %v2175 = vmul.f32 %v2164, %v2170
    %v2176 = vld [vmem:[%s9] sm:$0x1]
    %v2178 = vlaneseq
    %v2179 = vshrl.u32 %v2178, 7
    %v2180 = vsub.s32 0, %v2179
    %v2181 = vrot.slane %v2176, %v2180
    %v2183 = vadd.f32 %v2172, %v2181
    %v2184 = vadd.f32 %v2173, %v2181
    %v2185 = vadd.f32 %v2174, %v2181
    %v2186 = vadd.f32 %v2175, %v2181
    %2187 = vst.msk [vmem:[#allocation11] sm:$0xff] %vm127, %v2183
    %2188 = vst.msk [vmem:[#allocation11 + $0x8] sm:$0xff] %vm127, %v2184
    %2189 = vst.msk [vmem:[#allocation11 + $0x10] sm:$0xff] %vm127, %v2185
    %2190 = vst.msk [vmem:[#allocation11 + $0x18] sm:$0xff] %vm127, %v2186
    // Predicated region
    $region62: #{tpu_custom_call.1} parent=1 // pred_check
      _
    $region63: #{tpu_custom_call.1} parent=1 // pred_check_branch
      %2192 = sbr.rel (0) target = $region65
    $region64: #{tpu_custom_call.1} parent=1 // pred_region
      %s2194 = ssub.s32 512, 512
      %2195 = vsyncadd [#allocation4], %s2194
      %s2196 = sshll.u32 [#allocation11], 4
      %s2197 = int_to_ptr.vmem [resolvable:$true] %s2196
      %2202 = dma.vmem_to_hbm [thread:$0]  %s2197, 512, %s10, [#allocation4], 128, 128, 8
    $region65: #{tpu_custom_call.1} parent=1 // pred_fallthru
      _
    // Predicated region
    $region66: #{tpu_custom_call.1} parent=1 // pred_check
      _
    $region67: #{tpu_custom_call.1} parent=1 // pred_check_branch
      %2204 = sbr.rel (0) target = $region69
    $region68: #{tpu_custom_call.1} parent=1 // pred_region
      %2205 = dma.done [#allocation4], 512
    $region69: #{tpu_custom_call.1} parent=1 // pred_fallthru
      _
    %2206 = vsyncpa [#allocation3], 1
    %2207 = vsyncpa [#allocation6], 1
    %2208 = vsyncpa [#allocation9], 1
    %2209 = vsyncpa [#allocation4], 1

</llo_original>
